<compile_context>
chip_gen: v6e
topology: v6e:2x2x1
jax: 0.10.0
libtpu: 0.0.40
codegen_flags: <defaults>
</compile_context>

<pallas_src>
import functools

import jax
import jax.numpy as jnp
from jax.experimental import pallas as pl
from jax.experimental.pallas import tpu as pltpu


def text_encoder_kernel(ids_ref, iota_ref, wfold_ref, b1_ref, gamma_ref, beta_ref,
                        feat_ref, *, seq_len):
    B, St, _ = ids_ref.shape
    V = iota_ref.shape[-1]
    s = pl.program_id(0)

    @pl.when(s == 0)
    def _init():
        feat_ref[...] = jnp.zeros_like(feat_ref)

    # --- fused embedding gather + dense on the MXU: one_hot(ids) @ (embed @ w1) -----
    # padded positions were remapped to id = -1 in the wrapper -> all-zero one-hot row,
    # i.e. the masked embedding, so no separate mask multiply / relayout is needed.
    ids = ids_ref[...]                                                 # [B, St, 1] int32
    onehot = (ids == iota_ref[...][None, :, :]).astype(jnp.bfloat16)   # [B, St, V]
    h = jnp.dot(onehot.reshape(B * St, V), wfold_ref[...],
                preferred_element_type=jnp.float32) + b1_ref[...]      # [B*St, H] f32
    h = jax.nn.gelu(h, approximate=True)

    # --- streaming mean-pool accumulation directly into the resident output block ---
    feat_ref[...] += jnp.sum(h.reshape(B, St, -1), axis=1)             # [B, H]

    @pl.when(s == pl.num_programs(0) - 1)
    def _finalize():
        # transpose(1,2) + AvgPool1d(kernel_size=max_seq_length) + view == mean over S
        pooled = feat_ref[...] * (1.0 / seq_len)                       # [B, H]

        # BatchNorm1d(H), training mode => biased batch statistics, eps = 1e-5
        mu = jnp.mean(pooled, axis=0, keepdims=True)                   # [1, H]
        var = jnp.mean((pooled - mu) ** 2, axis=0, keepdims=True)      # [1, H]
        bn = ((pooled - mu) * jax.lax.rsqrt(var + 1e-5)
              * gamma_ref[...] + beta_ref[...])                        # [B, H]

        # F.normalize(p=2, dim=1, eps=1e-12); exact division (one-time epilogue)
        nrm = jnp.sqrt(jnp.sum(bn * bn, axis=1, keepdims=True))        # [B, 1]
        feat_ref[...] = bn / jnp.maximum(nrm, 1e-12)


def text_encoder_forward(input_ids, attention_mask, params, *, seq_tile=None):
    B, S = input_ids.shape
    V, H = params["embed"].shape
    if seq_tile is None:
        seq_tile = min(S, 256)          # big tile -> few grid steps, M = B*seq_tile >= 256
    assert S % seq_tile == 0, "sequence length must be a multiple of the seq tile"

    # Fold the padding mask into the gather: masked positions -> id -1 -> zero one-hot.
    masked_ids = jnp.where(attention_mask > 0, input_ids, -1).astype(jnp.int32)
    masked_ids = masked_ids[:, :, None]                                # [B, S, 1]

    # Fold embedding table and dense weight into a single bf16 MXU operand (there is no
    # nonlinearity between gather and dense):  onehot @ (embed @ w1) == (onehot@embed)@w1
    w_fold = jnp.dot(params["embed"].astype(jnp.bfloat16),
                     params["w1"].astype(jnp.bfloat16),
                     preferred_element_type=jnp.float32).astype(jnp.bfloat16)   # [V, H]

    # Resident lane iota for the one-hot compare (constant index_map -> loaded once).
    iota_v = jnp.arange(V, dtype=jnp.int32)[None, :]                   # [1, V]

    kernel = functools.partial(text_encoder_kernel, seq_len=S)

    cost = pl.CostEstimate(
        flops=2 * B * S * V * H,                    # single folded matmul
        transcendentals=B * S * H,                  # tanh inside GELU
        bytes_accessed=(masked_ids.size * 4 + iota_v.size * 4 + w_fold.size * 2
                        + 3 * H * 4 + B * H * 4),
    )

    return pl.pallas_call(
        kernel,
        grid=(S // seq_tile,),
        in_specs=[
            # ids: tiled over the sequence axis (double-buffered by the pipeline)
            pl.BlockSpec((B, seq_tile, 1), lambda s: (0, s, 0)),
            # iota / weights / BN params: constant index_map -> resident across steps
            pl.BlockSpec((1, V), lambda s: (0, 0)),
            pl.BlockSpec((V, H), lambda s: (0, 0)),
            pl.BlockSpec((1, H), lambda s: (0, 0)),
            pl.BlockSpec((1, H), lambda s: (0, 0)),
            pl.BlockSpec((1, H), lambda s: (0, 0)),
        ],
        # constant-index output block doubles as the pooled-sum accumulator
        out_specs=pl.BlockSpec((B, H), lambda s: (0, 0)),
        out_shape=jax.ShapeDtypeStruct((B, H), jnp.float32),
        compiler_params=pltpu.CompilerParams(
            dimension_semantics=("arbitrary",),        # sequence axis is a reduction
            vmem_limit_bytes=32 * 1024 * 1024,
        ),
        cost_estimate=cost,
    )(masked_ids, iota_v, w_fold, params["b1"], params["gamma"], params["beta"])


def _reference_forward(input_ids, attention_mask, params):
    """Pure-JAX reference (unfused gather + dense) with bf16 weight quantization."""
    embed = params["embed"].astype(jnp.bfloat16)
    w1 = params["w1"].astype(jnp.bfloat16)
    mask = attention_mask.astype(jnp.float32)[:, :, None]              # [B, S, 1]

    emb = embed[input_ids].astype(jnp.float32) * mask                  # [B, S, H]
    B, S, H = emb.shape
    h = jnp.dot(emb.reshape(B * S, H).astype(jnp.bfloat16), w1,
                preferred_element_type=jnp.float32) + params["b1"]
    h = jax.nn.gelu(h, approximate=True).reshape(B, S, H)

    pooled = jnp.mean(h, axis=1)                                       # [B, H]
    mu = jnp.mean(pooled, axis=0, keepdims=True)
    var = jnp.mean((pooled - mu) ** 2, axis=0, keepdims=True)
    bn = (pooled - mu) * jax.lax.rsqrt(var + 1e-5) * params["gamma"] + params["beta"]
    nrm = jnp.sqrt(jnp.sum(bn * bn, axis=1, keepdims=True))
    return bn / jnp.maximum(nrm, 1e-12)


if __name__ == "__main__":
    # Small but lane/sublane-aligned shapes: batch=8 (sublanes), seq=64 (one grid step,
    # M = B*S = 512 rows per matmul), hidden=128 (lanes), vocab=128.
    B, S, H, V = 8, 64, 128, 128

    key = jax.random.PRNGKey(0)
    k_emb, k_w1, k_ids = jax.random.split(key, 3)

    params = {
        "embed": jax.random.normal(k_emb, (V, H), jnp.float32) * 0.02,
        "w1": jax.random.normal(k_w1, (H, H), jnp.float32) * (1.0 / jnp.sqrt(H)),
        "b1": jnp.zeros((1, H), jnp.float32),
        # fresh nn.BatchNorm1d init: weight=1, bias=0
        "gamma": jnp.ones((1, H), jnp.float32),
        "beta": jnp.zeros((1, H), jnp.float32),
    }

    input_ids = jax.random.randint(k_ids, (B, S), 0, V, dtype=jnp.int32)
    attention_mask = jnp.ones((B, S), jnp.int32).at[:, S - 6:].set(0)

    feats = text_encoder_forward(input_ids, attention_mask, params)
    jax.block_until_ready(feats)
    assert feats.shape == (B, H)

    ref = _reference_forward(input_ids, attention_mask, params)
    # Tolerance covers the bf16 quantization of the folded embed @ w1 operand.
    assert jnp.allclose(feats, ref, atol=2e-2, rtol=2e-2), (
        float(jnp.max(jnp.abs(feats - ref))))

    print("KERNEL_OK")
</pallas_src>

<mosaic_0001>
module attributes {stable_mosaic.version = 11 : i64} {
  func.func @text_encoder_kernel(%arg0: i32, %arg1: memref<8x64x1xi32, #tpu.memory_space<vmem>>, %arg2: memref<1x128xi32, #tpu.memory_space<vmem>>, %arg3: memref<128x128xbf16, #tpu.memory_space<vmem>>, %arg4: memref<1x128xf32, #tpu.memory_space<vmem>>, %arg5: memref<1x128xf32, #tpu.memory_space<vmem>>, %arg6: memref<1x128xf32, #tpu.memory_space<vmem>>, %arg7: memref<8x128xf32, #tpu.memory_space<vmem>>) attributes {dimension_semantics = [#tpu.dimension_semantics<arbitrary>], iteration_bounds = array<i64: 1>, scalar_prefetch = 0 : i64, scratch_operands = 0 : i64, tpu.core_type = #tpu.core_type<tc>, window_params = [{transform_indices = @transform_0, window_bounds = array<i64: 8, 64, 1>}, {pipeline_mode = #tpu.pipeline_mode<synchronous>, transform_indices = @transform_1, window_bounds = array<i64: 1, 128>}, {pipeline_mode = #tpu.pipeline_mode<synchronous>, transform_indices = @transform_2, window_bounds = array<i64: 128, 128>}, {pipeline_mode = #tpu.pipeline_mode<synchronous>, transform_indices = @transform_3, window_bounds = array<i64: 1, 128>}, {pipeline_mode = #tpu.pipeline_mode<synchronous>, transform_indices = @transform_4, window_bounds = array<i64: 1, 128>}, {pipeline_mode = #tpu.pipeline_mode<synchronous>, transform_indices = @transform_5, window_bounds = array<i64: 1, 128>}, {pipeline_mode = #tpu.pipeline_mode<synchronous>, transform_indices = @transform_6, window_bounds = array<i64: 8, 128>}]} {
    %c0_i32 = arith.constant 0 : i32
    %0 = arith.cmpi eq, %arg0, %c0_i32 : i32
    %1 = arith.extui %0 : i1 to i32
    %c0_i32_0 = arith.constant 0 : i32
    %2 = arith.cmpi ne, %1, %c0_i32_0 : i32
    scf.if %2 {
      %cst_20 = arith.constant 0.000000e+00 : f32
      %39 = vector.broadcast %cst_20 : f32 to vector<8x128xf32>
      %c0_21 = arith.constant 0 : index
      %c0_22 = arith.constant 0 : index
      %40 = vector.load %arg7[%c0_21, %c0_22] : memref<8x128xf32, #tpu.memory_space<vmem>>, vector<8x128xf32>
      tpu.vector_store %arg7[%c0_21, %c0_22], %39 {strides = array<i32>} : memref<8x128xf32, #tpu.memory_space<vmem>>, vector<8x128xf32>,
    } else {
    }
    %c0 = arith.constant 0 : index
    %c0_1 = arith.constant 0 : index
    %c0_2 = arith.constant 0 : index
    %3 = vector.load %arg1[%c0, %c0_1, %c0_2] : memref<8x64x1xi32, #tpu.memory_space<vmem>>, vector<8x64x1xi32>
    %c0_3 = arith.constant 0 : index
    %c0_4 = arith.constant 0 : index
    %4 = vector.load %arg2[%c0_3, %c0_4] : memref<1x128xi32, #tpu.memory_space<vmem>>, vector<1x128xi32>
    %5 = vector.shape_cast %4 : vector<1x128xi32> to vector<1x1x128xi32>
    %6 = vector.broadcast %3 : vector<8x64x1xi32> to vector<8x64x128xi32>
    %7 = vector.broadcast %5 : vector<1x1x128xi32> to vector<8x64x128xi32>
    %8 = arith.cmpi eq, %6, %7 : vector<8x64x128xi32>
    %9 = arith.extui %8 : vector<8x64x128xi1> to vector<8x64x128xi32>
    %10 = arith.sitofp %9 : vector<8x64x128xi32> to vector<8x64x128xf32>
    %11 = arith.truncf %10 : vector<8x64x128xf32> to vector<8x64x128xbf16>
    %12 = vector.shape_cast %11 : vector<8x64x128xbf16> to vector<512x128xbf16>
    %c0_5 = arith.constant 0 : index
    %c0_6 = arith.constant 0 : index
    %13 = vector.load %arg3[%c0_5, %c0_6] : memref<128x128xbf16, #tpu.memory_space<vmem>>, vector<128x128xbf16>
    %cst = arith.constant dense<0.000000e+00> : vector<512x128xf32>
    %14 = tpu.matmul %12, %13, %cst {dimension_numbers = #tpu.dot_dimension_numbers<[1], [0], [0], [1], [0, 0, 1, 1], [], []>} : vector<512x128xbf16>, vector<128x128xbf16>, vector<512x128xf32> -> vector<512x128xf32>
    %c0_7 = arith.constant 0 : index
    %c0_8 = arith.constant 0 : index
    %15 = vector.load %arg4[%c0_7, %c0_8] : memref<1x128xf32, #tpu.memory_space<vmem>>, vector<1x128xf32>
    %16 = vector.broadcast %15 : vector<1x128xf32> to vector<512x128xf32>
    %17 = arith.addf %14, %16 : vector<512x128xf32>
    %18 = arith.mulf %17, %17 : vector<512x128xf32>
    %19 = arith.mulf %17, %18 : vector<512x128xf32>
    %cst_9 = arith.constant 4.471500e-02 : f32
    %20 = vector.broadcast %cst_9 : f32 to vector<512x128xf32>
    %21 = arith.mulf %20, %19 : vector<512x128xf32>
    %22 = arith.addf %17, %21 : vector<512x128xf32>
    %cst_10 = arith.constant 0.797884583 : f32
    %23 = vector.broadcast %cst_10 : f32 to vector<512x128xf32>
    %24 = arith.mulf %23, %22 : vector<512x128xf32>
    %25 = math.tanh %24 : vector<512x128xf32>
    %cst_11 = arith.constant 1.000000e+00 : f32
    %26 = vector.broadcast %cst_11 : f32 to vector<512x128xf32>
    %27 = arith.addf %26, %25 : vector<512x128xf32>
    %cst_12 = arith.constant 5.000000e-01 : f32
    %28 = vector.broadcast %cst_12 : f32 to vector<512x128xf32>
    %29 = arith.mulf %28, %27 : vector<512x128xf32>
    %30 = arith.mulf %17, %29 : vector<512x128xf32>
    %c0_13 = arith.constant 0 : index
    %c0_14 = arith.constant 0 : index
    %31 = vector.load %arg7[%c0_13, %c0_14] : memref<8x128xf32, #tpu.memory_space<vmem>>, vector<8x128xf32>
    %32 = vector.shape_cast %30 : vector<512x128xf32> to vector<8x64x128xf32>
    %cst_15 = arith.constant dense<0.000000e+00> : vector<8x128xf32>
    %33 = vector.multi_reduction <add>, %32, %cst_15 [1] : vector<8x64x128xf32> to vector<8x128xf32>
    %34 = arith.addf %31, %33 : vector<8x128xf32>
    %c0_16 = arith.constant 0 : index
    %c0_17 = arith.constant 0 : index
    %35 = vector.load %arg7[%c0_16, %c0_17] : memref<8x128xf32, #tpu.memory_space<vmem>>, vector<8x128xf32>
    tpu.vector_store %arg7[%c0_16, %c0_17], %34 {strides = array<i32>} : memref<8x128xf32, #tpu.memory_space<vmem>>, vector<8x128xf32>,
    %c0_i32_18 = arith.constant 0 : i32
    %36 = arith.cmpi eq, %arg0, %c0_i32_18 : i32
    %37 = arith.extui %36 : i1 to i32
    %c0_i32_19 = arith.constant 0 : i32
    %38 = arith.cmpi ne, %37, %c0_i32_19 : i32
    scf.if %38 {
      %c0_20 = arith.constant 0 : index
      %c0_21 = arith.constant 0 : index
      %39 = vector.load %arg7[%c0_20, %c0_21] : memref<8x128xf32, #tpu.memory_space<vmem>>, vector<8x128xf32>
      %cst_22 = arith.constant 1.562500e-02 : f32
      %40 = vector.broadcast %cst_22 : f32 to vector<8x128xf32>
      %41 = arith.mulf %39, %40 : vector<8x128xf32>
      %cst_23 = arith.constant dense<0.000000e+00> : vector<128xf32>
      %42 = vector.multi_reduction <add>, %41, %cst_23 [0] : vector<8x128xf32> to vector<128xf32>
      %43 = vector.shape_cast %42 : vector<128xf32> to vector<1x128xf32>
      %cst_24 = arith.constant 8.000000e+00 : f32
      %44 = vector.broadcast %cst_24 : f32 to vector<1x128xf32>
      %45 = arith.divf %43, %44 : vector<1x128xf32>
      %46 = vector.broadcast %45 : vector<1x128xf32> to vector<8x128xf32>
      %47 = arith.subf %41, %46 : vector<8x128xf32>
      %48 = arith.mulf %47, %47 : vector<8x128xf32>
      %cst_25 = arith.constant dense<0.000000e+00> : vector<128xf32>
      %49 = vector.multi_reduction <add>, %48, %cst_25 [0] : vector<8x128xf32> to vector<128xf32>
      %50 = vector.shape_cast %49 : vector<128xf32> to vector<1x128xf32>
      %cst_26 = arith.constant 8.000000e+00 : f32
      %51 = vector.broadcast %cst_26 : f32 to vector<1x128xf32>
      %52 = arith.divf %50, %51 : vector<1x128xf32>
      %53 = vector.broadcast %45 : vector<1x128xf32> to vector<8x128xf32>
      %54 = arith.subf %41, %53 : vector<8x128xf32>
      %cst_27 = arith.constant 9.99999974E-6 : f32
      %55 = vector.broadcast %cst_27 : f32 to vector<1x128xf32>
      %56 = arith.addf %52, %55 : vector<1x128xf32>
      %57 = math.rsqrt %56 : vector<1x128xf32>
      %58 = vector.broadcast %57 : vector<1x128xf32> to vector<8x128xf32>
      %59 = arith.mulf %54, %58 : vector<8x128xf32>
      %c0_28 = arith.constant 0 : index
      %c0_29 = arith.constant 0 : index
      %60 = vector.load %arg5[%c0_28, %c0_29] : memref<1x128xf32, #tpu.memory_space<vmem>>, vector<1x128xf32>
      %61 = vector.broadcast %60 : vector<1x128xf32> to vector<8x128xf32>
      %62 = arith.mulf %59, %61 : vector<8x128xf32>
      %c0_30 = arith.constant 0 : index
      %c0_31 = arith.constant 0 : index
      %63 = vector.load %arg6[%c0_30, %c0_31] : memref<1x128xf32, #tpu.memory_space<vmem>>, vector<1x128xf32>
      %64 = vector.broadcast %63 : vector<1x128xf32> to vector<8x128xf32>
      %65 = arith.addf %62, %64 : vector<8x128xf32>
      %66 = arith.mulf %65, %65 : vector<8x128xf32>
      %cst_32 = arith.constant dense<0.000000e+00> : vector<8xf32>
      %67 = vector.multi_reduction <add>, %66, %cst_32 [1] : vector<8x128xf32> to vector<8xf32>
      %68 = vector.shape_cast %67 : vector<8xf32> to vector<8x1xf32>
      %69 = math.sqrt %68 : vector<8x1xf32>
      %cst_33 = arith.constant 9.99999996E-13 : f32
      %70 = vector.broadcast %cst_33 : f32 to vector<8x1xf32>
      %71 = arith.maximumf %69, %70 : vector<8x1xf32>
      %72 = vector.broadcast %71 : vector<8x1xf32> to vector<8x128xf32>
      %73 = arith.divf %65, %72 : vector<8x128xf32>
      %c0_34 = arith.constant 0 : index
      %c0_35 = arith.constant 0 : index
      %74 = vector.load %arg7[%c0_34, %c0_35] : memref<8x128xf32, #tpu.memory_space<vmem>>, vector<8x128xf32>
      tpu.vector_store %arg7[%c0_34, %c0_35], %73 {strides = array<i32>} : memref<8x128xf32, #tpu.memory_space<vmem>>, vector<8x128xf32>,
    } else {
    }
    return
  }
  func.func @transform_0(%arg0: i32) -> (i32, i32, i32) {
    %c0_i32 = arith.constant 0 : i32
    %c0_i32_0 = arith.constant 0 : i32
    %c0_i32_1 = arith.constant 0 : i32
    return %c0_i32, %arg0, %c0_i32_0 : i32, i32, i32
  }
  func.func @transform_1(%arg0: i32) -> (i32, i32) {
    %c0_i32 = arith.constant 0 : i32
    %c0_i32_0 = arith.constant 0 : i32
    %c0_i32_1 = arith.constant 0 : i32
    return %c0_i32, %c0_i32_0 : i32, i32
  }
  func.func @transform_2(%arg0: i32) -> (i32, i32) {
    %c0_i32 = arith.constant 0 : i32
    %c0_i32_0 = arith.constant 0 : i32
    %c0_i32_1 = arith.constant 0 : i32
    return %c0_i32, %c0_i32_0 : i32, i32
  }
  func.func @transform_3(%arg0: i32) -> (i32, i32) {
    %c0_i32 = arith.constant 0 : i32
    %c0_i32_0 = arith.constant 0 : i32
    %c0_i32_1 = arith.constant 0 : i32
    return %c0_i32, %c0_i32_0 : i32, i32
  }
  func.func @transform_4(%arg0: i32) -> (i32, i32) {
    %c0_i32 = arith.constant 0 : i32
    %c0_i32_0 = arith.constant 0 : i32
    %c0_i32_1 = arith.constant 0 : i32
    return %c0_i32, %c0_i32_0 : i32, i32
  }
  func.func @transform_5(%arg0: i32) -> (i32, i32) {
    %c0_i32 = arith.constant 0 : i32
    %c0_i32_0 = arith.constant 0 : i32
    %c0_i32_1 = arith.constant 0 : i32
    return %c0_i32, %c0_i32_0 : i32, i32
  }
  func.func @transform_6(%arg0: i32) -> (i32, i32) {
    %c0_i32 = arith.constant 0 : i32
    %c0_i32_0 = arith.constant 0 : i32
    %c0_i32_1 = arith.constant 0 : i32
    return %c0_i32, %c0_i32_0 : i32, i32
  }
}

</mosaic_0001>

<llo_original>
// kernel: tpu_custom_call.1
$region0: #{tpu_custom_call.1}
  #allocation0 [shape = 'u32[]', space=smem, size = 0x4, offset = 0x4, fixed_abs, tag = 'smem constant byte address 0x4 - core index']
  #allocation1 [shape = 'u32[144,128]{1,0:T(1,128)}', space=vmem, size = 0x12000, scoped, tag = 'internal scratch']
  %s0 = inlined_call_operand.vmem [shape: s32[8,64,1], index: 0, kind: input, shape index: {}]
  %s1 = inlined_call_operand.vmem [shape: s32[1,128], index: 1, kind: input, shape index: {}]
  %s2 = inlined_call_operand.vmem [shape: bf16[128,128], index: 2, kind: input, shape index: {}]
  %s3 = inlined_call_operand.vmem [shape: f32[1,128], index: 3, kind: input, shape index: {}]
  %s4 = inlined_call_operand.vmem [shape: f32[1,128], index: 4, kind: input, shape index: {}]
  %s5 = inlined_call_operand.vmem [shape: f32[1,128], index: 5, kind: input, shape index: {}]
  %s6 = inlined_call_operand.hbm [shape: f32[8,128], index: 6, kind: output, shape index: {}]
  %s7 = sld [smem:[#allocation0]]
  $region42: #{tpu_custom_call.1} parent=0
    _
  %s9 = ssub.s32 1, %s7
  %s10 = scalar_select 0, %s9, %s7
  $region1: #{tpu_custom_call.1} parent=0
    #allocation2 [shape = 'u8[4096]{0}', space=vmem, size = 0x1000, scoped, tag = 'output window, operand 0, single buffered']
    #allocation3 [shape = 's32[1]{0}', space=sflag, size = 0x4, scoped, tag = 'scoped memory for tpu_custom_call.1']
    %11 = vsyncpa [#allocation3], 0
    // Predicated region
    $region2: #{tpu_custom_call.1} parent=1 // pred_check
      _
    $region3: #{tpu_custom_call.1} parent=1 // pred_check_branch
      %13 = sbr.rel (0) target = $region5
    $region4: #{tpu_custom_call.1} parent=1 // pred_region
      _
    $region5: #{tpu_custom_call.1} parent=1 // pred_fallthru
      _
    // Predicated region
    $region6: #{tpu_custom_call.1} parent=1 // pred_check
      _
    $region7: #{tpu_custom_call.1} parent=1 // pred_check_branch
      %15 = sbr.rel (0) target = $region9
    $region8: #{tpu_custom_call.1} parent=1 // pred_region
      _
    $region9: #{tpu_custom_call.1} parent=1 // pred_fallthru
      _
    // Predicated region
    $region10: #{tpu_custom_call.1} parent=1 // pred_check
      _
    $region11: #{tpu_custom_call.1} parent=1 // pred_check_branch
      %17 = sbr.rel (0) target = $region13
    $region12: #{tpu_custom_call.1} parent=1 // pred_region
      _
    $region13: #{tpu_custom_call.1} parent=1 // pred_fallthru
      _
    // Predicated region
    $region14: #{tpu_custom_call.1} parent=1 // pred_check
      _
    $region15: #{tpu_custom_call.1} parent=1 // pred_check_branch
      %19 = sbr.rel (0) target = $region17
    $region16: #{tpu_custom_call.1} parent=1 // pred_region
      _
    $region17: #{tpu_custom_call.1} parent=1 // pred_fallthru
      _
    // Predicated region
    $region18: #{tpu_custom_call.1} parent=1 // pred_check
      _
    $region19: #{tpu_custom_call.1} parent=1 // pred_check_branch
      %21 = sbr.rel (0) target = $region21
    $region20: #{tpu_custom_call.1} parent=1 // pred_region
      _
    $region21: #{tpu_custom_call.1} parent=1 // pred_fallthru
      _
    // Predicated region
    $region22: #{tpu_custom_call.1} parent=1 // pred_check
      _
    $region23: #{tpu_custom_call.1} parent=1 // pred_check_branch
      %23 = sbr.rel (0) target = $region25
    $region24: #{tpu_custom_call.1} parent=1 // pred_region
      _
    $region25: #{tpu_custom_call.1} parent=1 // pred_fallthru
      _
    %p25 = scmp.eq.s32.totalorder 0, 0
    // Predicated region
    $region26: #{tpu_custom_call.1} parent=1 // pred_check
      %p26 = pneg %p25
    $region27: #{tpu_custom_call.1} parent=1 // pred_check_branch
      %28 = sbr.rel (%p26) target = $region29
    $region28: #{tpu_custom_call.1} parent=1 // pred_region
      %29 = vst [vmem:[#allocation2] sm:$0xff] 0.0
    $region29: #{tpu_custom_call.1} parent=1 // pred_fallthru
      _
    %v30 = vld [vmem:[%s0] sm:$0xff]
    %v31 = vld [vmem:[%s0 + $0x8] sm:$0xff]
    %v32 = vld [vmem:[%s0 + $0x10] sm:$0xff]
    %v33 = vld [vmem:[%s0 + $0x18] sm:$0xff]
    %v34 = vld [vmem:[%s0 + $0x20] sm:$0xff]
    %v35 = vld [vmem:[%s0 + $0x28] sm:$0xff]
    %v36 = vld [vmem:[%s0 + $0x30] sm:$0xff]
    %v37 = vld [vmem:[%s0 + $0x38] sm:$0xff]
    %v38 = vld [vmem:[%s0 + $0x40] sm:$0xff]
    %v39 = vld [vmem:[%s0 + $0x48] sm:$0xff]
    %v40 = vld [vmem:[%s0 + $0x50] sm:$0xff]
    %v41 = vld [vmem:[%s0 + $0x58] sm:$0xff]
    %v42 = vld [vmem:[%s0 + $0x60] sm:$0xff]
    %v43 = vld [vmem:[%s0 + $0x68] sm:$0xff]
    %v44 = vld [vmem:[%s0 + $0x70] sm:$0xff]
    %v45 = vld [vmem:[%s0 + $0x78] sm:$0xff]
    %v46 = vld [vmem:[%s0 + $0x80] sm:$0xff]
    %v47 = vld [vmem:[%s0 + $0x88] sm:$0xff]
    %v48 = vld [vmem:[%s0 + $0x90] sm:$0xff]
    %v49 = vld [vmem:[%s0 + $0x98] sm:$0xff]
    %v50 = vld [vmem:[%s0 + $0xa0] sm:$0xff]
    %v51 = vld [vmem:[%s0 + $0xa8] sm:$0xff]
    %v52 = vld [vmem:[%s0 + $0xb0] sm:$0xff]
    %v53 = vld [vmem:[%s0 + $0xb8] sm:$0xff]
    %v54 = vld [vmem:[%s0 + $0xc0] sm:$0xff]
    %v55 = vld [vmem:[%s0 + $0xc8] sm:$0xff]
    %v56 = vld [vmem:[%s0 + $0xd0] sm:$0xff]
    %v57 = vld [vmem:[%s0 + $0xd8] sm:$0xff]
    %v58 = vld [vmem:[%s0 + $0xe0] sm:$0xff]
    %v59 = vld [vmem:[%s0 + $0xe8] sm:$0xff]
    %v60 = vld [vmem:[%s0 + $0xf0] sm:$0xff]
    %v61 = vld [vmem:[%s0 + $0xf8] sm:$0xff]
    %v62 = vld [vmem:[%s0 + $0x100] sm:$0xff]
    %v63 = vld [vmem:[%s0 + $0x108] sm:$0xff]
    %v64 = vld [vmem:[%s0 + $0x110] sm:$0xff]
    %v65 = vld [vmem:[%s0 + $0x118] sm:$0xff]
    %v66 = vld [vmem:[%s0 + $0x120] sm:$0xff]
    %v67 = vld [vmem:[%s0 + $0x128] sm:$0xff]
    %v68 = vld [vmem:[%s0 + $0x130] sm:$0xff]
    %v69 = vld [vmem:[%s0 + $0x138] sm:$0xff]
    %v70 = vld [vmem:[%s0 + $0x140] sm:$0xff]
    %v71 = vld [vmem:[%s0 + $0x148] sm:$0xff]
    %v72 = vld [vmem:[%s0 + $0x150] sm:$0xff]
    %v73 = vld [vmem:[%s0 + $0x158] sm:$0xff]
    %v74 = vld [vmem:[%s0 + $0x160] sm:$0xff]
    %v75 = vld [vmem:[%s0 + $0x168] sm:$0xff]
    %v76 = vld [vmem:[%s0 + $0x170] sm:$0xff]
    %v77 = vld [vmem:[%s0 + $0x178] sm:$0xff]
    %v78 = vld [vmem:[%s0 + $0x180] sm:$0xff]
    %v79 = vld [vmem:[%s0 + $0x188] sm:$0xff]
    %v80 = vld [vmem:[%s0 + $0x190] sm:$0xff]
    %v81 = vld [vmem:[%s0 + $0x198] sm:$0xff]
    %v82 = vld [vmem:[%s0 + $0x1a0] sm:$0xff]
    %v83 = vld [vmem:[%s0 + $0x1a8] sm:$0xff]
    %v84 = vld [vmem:[%s0 + $0x1b0] sm:$0xff]
    %v85 = vld [vmem:[%s0 + $0x1b8] sm:$0xff]
    %v86 = vld [vmem:[%s0 + $0x1c0] sm:$0xff]
    %v87 = vld [vmem:[%s0 + $0x1c8] sm:$0xff]
    %v88 = vld [vmem:[%s0 + $0x1d0] sm:$0xff]
    %v89 = vld [vmem:[%s0 + $0x1d8] sm:$0xff]
    %v90 = vld [vmem:[%s0 + $0x1e0] sm:$0xff]
    %v91 = vld [vmem:[%s0 + $0x1e8] sm:$0xff]
    %v92 = vld [vmem:[%s0 + $0x1f0] sm:$0xff]
    %v93 = vld [vmem:[%s0 + $0x1f8] sm:$0xff]
    %v94 = vld [vmem:[%s1] sm:$0x1]
    %95 = vset.pattern.permute.xlu0 0
    %96 = vperm.xlu0 %95, %v30
    %v97 = vpop.permute.xlu0 %96
    %98 = vset.pattern.permute.xlu0 0
    %99 = vperm.xlu0 %98, %v31
    %v100 = vpop.permute.xlu0 %99
    %101 = vset.pattern.permute.xlu0 0
    %102 = vperm.xlu0 %101, %v32
    %v103 = vpop.permute.xlu0 %102
    %104 = vset.pattern.permute.xlu0 0
    %105 = vperm.xlu0 %104, %v33
    %v106 = vpop.permute.xlu0 %105
    %107 = vset.pattern.permute.xlu0 0
    %108 = vperm.xlu0 %107, %v34
    %v109 = vpop.permute.xlu0 %108
    %110 = vset.pattern.permute.xlu0 0
    %111 = vperm.xlu0 %110, %v35
    %v112 = vpop.permute.xlu0 %111
    %113 = vset.pattern.permute.xlu0 0
    %114 = vperm.xlu0 %113, %v36
    %v115 = vpop.permute.xlu0 %114
    %116 = vset.pattern.permute.xlu0 0
    %117 = vperm.xlu0 %116, %v37
    %v118 = vpop.permute.xlu0 %117
    %119 = vset.pattern.permute.xlu0 0
    %120 = vperm.xlu0 %119, %v38
    %v121 = vpop.permute.xlu0 %120
    %122 = vset.pattern.permute.xlu0 0
    %123 = vperm.xlu0 %122, %v39
    %v124 = vpop.permute.xlu0 %123
    %125 = vset.pattern.permute.xlu0 0
    %126 = vperm.xlu0 %125, %v40
    %v127 = vpop.permute.xlu0 %126
    %128 = vset.pattern.permute.xlu0 0
    %129 = vperm.xlu0 %128, %v41
    %v130 = vpop.permute.xlu0 %129
    %131 = vset.pattern.permute.xlu0 0
    %132 = vperm.xlu0 %131, %v42
    %v133 = vpop.permute.xlu0 %132
    %134 = vset.pattern.permute.xlu0 0
    %135 = vperm.xlu0 %134, %v43
    %v136 = vpop.permute.xlu0 %135
    %137 = vset.pattern.permute.xlu0 0
    %138 = vperm.xlu0 %137, %v44
    %v139 = vpop.permute.xlu0 %138
    %140 = vset.pattern.permute.xlu0 0
    %141 = vperm.xlu0 %140, %v45
    %v142 = vpop.permute.xlu0 %141
    %143 = vset.pattern.permute.xlu0 0
    %144 = vperm.xlu0 %143, %v46
    %v145 = vpop.permute.xlu0 %144
    %146 = vset.pattern.permute.xlu0 0
    %147 = vperm.xlu0 %146, %v47
    %v148 = vpop.permute.xlu0 %147
    %149 = vset.pattern.permute.xlu0 0
    %150 = vperm.xlu0 %149, %v48
    %v151 = vpop.permute.xlu0 %150
    %152 = vset.pattern.permute.xlu0 0
    %153 = vperm.xlu0 %152, %v49
    %v154 = vpop.permute.xlu0 %153
    %155 = vset.pattern.permute.xlu0 0
    %156 = vperm.xlu0 %155, %v50
    %v157 = vpop.permute.xlu0 %156
    %158 = vset.pattern.permute.xlu0 0
    %159 = vperm.xlu0 %158, %v51
    %v160 = vpop.permute.xlu0 %159
    %161 = vset.pattern.permute.xlu0 0
    %162 = vperm.xlu0 %161, %v52
    %v163 = vpop.permute.xlu0 %162
    %164 = vset.pattern.permute.xlu0 0
    %165 = vperm.xlu0 %164, %v53
    %v166 = vpop.permute.xlu0 %165
    %167 = vset.pattern.permute.xlu0 0
    %168 = vperm.xlu0 %167, %v54
    %v169 = vpop.permute.xlu0 %168
    %170 = vset.pattern.permute.xlu0 0
    %171 = vperm.xlu0 %170, %v55
    %v172 = vpop.permute.xlu0 %171
    %173 = vset.pattern.permute.xlu0 0
    %174 = vperm.xlu0 %173, %v56
    %v175 = vpop.permute.xlu0 %174
    %176 = vset.pattern.permute.xlu0 0
    %177 = vperm.xlu0 %176, %v57
    %v178 = vpop.permute.xlu0 %177
    %179 = vset.pattern.permute.xlu0 0
    %180 = vperm.xlu0 %179, %v58
    %v181 = vpop.permute.xlu0 %180
    %182 = vset.pattern.permute.xlu0 0
    %183 = vperm.xlu0 %182, %v59
    %v184 = vpop.permute.xlu0 %183
    %185 = vset.pattern.permute.xlu0 0
    %186 = vperm.xlu0 %185, %v60
    %v187 = vpop.permute.xlu0 %186
    %188 = vset.pattern.permute.xlu0 0
    %189 = vperm.xlu0 %188, %v61
    %v190 = vpop.permute.xlu0 %189
    %191 = vset.pattern.permute.xlu0 0
    %192 = vperm.xlu0 %191, %v62
    %v193 = vpop.permute.xlu0 %192
    %194 = vset.pattern.permute.xlu0 0
    %195 = vperm.xlu0 %194, %v63
    %v196 = vpop.permute.xlu0 %195
    %197 = vset.pattern.permute.xlu0 0
    %198 = vperm.xlu0 %197, %v64
    %v199 = vpop.permute.xlu0 %198
    %200 = vset.pattern.permute.xlu0 0
    %201 = vperm.xlu0 %200, %v65
    %v202 = vpop.permute.xlu0 %201
    %203 = vset.pattern.permute.xlu0 0
    %204 = vperm.xlu0 %203, %v66
    %v205 = vpop.permute.xlu0 %204
    %206 = vset.pattern.permute.xlu0 0
    %207 = vperm.xlu0 %206, %v67
    %v208 = vpop.permute.xlu0 %207
    %209 = vset.pattern.permute.xlu0 0
    %210 = vperm.xlu0 %209, %v68
    %v211 = vpop.permute.xlu0 %210
    %212 = vset.pattern.permute.xlu0 0
    %213 = vperm.xlu0 %212, %v69
    %v214 = vpop.permute.xlu0 %213
    %215 = vset.pattern.permute.xlu0 0
    %216 = vperm.xlu0 %215, %v70
    %v217 = vpop.permute.xlu0 %216
    %218 = vset.pattern.permute.xlu0 0
    %219 = vperm.xlu0 %218, %v71
    %v220 = vpop.permute.xlu0 %219
    %221 = vset.pattern.permute.xlu0 0
    %222 = vperm.xlu0 %221, %v72
    %v223 = vpop.permute.xlu0 %222
    %224 = vset.pattern.permute.xlu0 0
    %225 = vperm.xlu0 %224, %v73
    %v226 = vpop.permute.xlu0 %225
    %227 = vset.pattern.permute.xlu0 0
    %228 = vperm.xlu0 %227, %v74
    %v229 = vpop.permute.xlu0 %228
    %230 = vset.pattern.permute.xlu0 0
    %231 = vperm.xlu0 %230, %v75
    %v232 = vpop.permute.xlu0 %231
    %233 = vset.pattern.permute.xlu0 0
    %234 = vperm.xlu0 %233, %v76
    %v235 = vpop.permute.xlu0 %234
    %236 = vset.pattern.permute.xlu0 0
    %237 = vperm.xlu0 %236, %v77
    %v238 = vpop.permute.xlu0 %237
    %239 = vset.pattern.permute.xlu0 0
    %240 = vperm.xlu0 %239, %v78
    %v241 = vpop.permute.xlu0 %240
    %242 = vset.pattern.permute.xlu0 0
    %243 = vperm.xlu0 %242, %v79
    %v244 = vpop.permute.xlu0 %243
    %245 = vset.pattern.permute.xlu0 0
    %246 = vperm.xlu0 %245, %v80
    %v247 = vpop.permute.xlu0 %246
    %248 = vset.pattern.permute.xlu0 0
    %249 = vperm.xlu0 %248, %v81
    %v250 = vpop.permute.xlu0 %249
    %251 = vset.pattern.permute.xlu0 0
    %252 = vperm.xlu0 %251, %v82
    %v253 = vpop.permute.xlu0 %252
    %254 = vset.pattern.permute.xlu0 0
    %255 = vperm.xlu0 %254, %v83
    %v256 = vpop.permute.xlu0 %255
    %257 = vset.pattern.permute.xlu0 0
    %258 = vperm.xlu0 %257, %v84
    %v259 = vpop.permute.xlu0 %258
    %260 = vset.pattern.permute.xlu0 0
    %261 = vperm.xlu0 %260, %v85
    %v262 = vpop.permute.xlu0 %261
    %263 = vset.pattern.permute.xlu0 0
    %264 = vperm.xlu0 %263, %v86
    %v265 = vpop.permute.xlu0 %264
    %266 = vset.pattern.permute.xlu0 0
    %267 = vperm.xlu0 %266, %v87
    %v268 = vpop.permute.xlu0 %267
    %269 = vset.pattern.permute.xlu0 0
    %270 = vperm.xlu0 %269, %v88
    %v271 = vpop.permute.xlu0 %270
    %272 = vset.pattern.permute.xlu0 0
    %273 = vperm.xlu0 %272, %v89
    %v274 = vpop.permute.xlu0 %273
    %275 = vset.pattern.permute.xlu0 0
    %276 = vperm.xlu0 %275, %v90
    %v277 = vpop.permute.xlu0 %276
    %278 = vset.pattern.permute.xlu0 0
    %279 = vperm.xlu0 %278, %v91
    %v280 = vpop.permute.xlu0 %279
    %281 = vset.pattern.permute.xlu0 0
    %282 = vperm.xlu0 %281, %v92
    %v283 = vpop.permute.xlu0 %282
    %284 = vset.pattern.permute.xlu0 0
    %285 = vperm.xlu0 %284, %v93
    %v286 = vpop.permute.xlu0 %285
    %v287 = vlaneseq
    %v288 = vshrl.u32 %v287, 7
    %v289 = vsub.s32 0, %v288
    %v290 = vrot.slane %v94, %v289
    %vm291 = vcmp.eq.s32.totalorder %v97, %v290
    %vm292 = vcmp.eq.s32.totalorder %v100, %v290
    %vm293 = vcmp.eq.s32.totalorder %v103, %v290
    %vm294 = vcmp.eq.s32.totalorder %v106, %v290
    %vm295 = vcmp.eq.s32.totalorder %v109, %v290
    %vm296 = vcmp.eq.s32.totalorder %v112, %v290
    %vm297 = vcmp.eq.s32.totalorder %v115, %v290
    %vm298 = vcmp.eq.s32.totalorder %v118, %v290
    %vm299 = vcmp.eq.s32.totalorder %v121, %v290
    %vm300 = vcmp.eq.s32.totalorder %v124, %v290
    %vm301 = vcmp.eq.s32.totalorder %v127, %v290
    %vm302 = vcmp.eq.s32.totalorder %v130, %v290
    %vm303 = vcmp.eq.s32.totalorder %v133, %v290
    %vm304 = vcmp.eq.s32.totalorder %v136, %v290
    %vm305 = vcmp.eq.s32.totalorder %v139, %v290
    %vm306 = vcmp.eq.s32.totalorder %v142, %v290
    %vm307 = vcmp.eq.s32.totalorder %v145, %v290
    %vm308 = vcmp.eq.s32.totalorder %v148, %v290
    %vm309 = vcmp.eq.s32.totalorder %v151, %v290
    %vm310 = vcmp.eq.s32.totalorder %v154, %v290
    %vm311 = vcmp.eq.s32.totalorder %v157, %v290
    %vm312 = vcmp.eq.s32.totalorder %v160, %v290
    %vm313 = vcmp.eq.s32.totalorder %v163, %v290
    %vm314 = vcmp.eq.s32.totalorder %v166, %v290
    %vm315 = vcmp.eq.s32.totalorder %v169, %v290
    %vm316 = vcmp.eq.s32.totalorder %v172, %v290
    %vm317 = vcmp.eq.s32.totalorder %v175, %v290
    %vm318 = vcmp.eq.s32.totalorder %v178, %v290
    %vm319 = vcmp.eq.s32.totalorder %v181, %v290
    %vm320 = vcmp.eq.s32.totalorder %v184, %v290
    %vm321 = vcmp.eq.s32.totalorder %v187, %v290
    %vm322 = vcmp.eq.s32.totalorder %v190, %v290
    %vm323 = vcmp.eq.s32.totalorder %v193, %v290
    %vm324 = vcmp.eq.s32.totalorder %v196, %v290
    %vm325 = vcmp.eq.s32.totalorder %v199, %v290
    %vm326 = vcmp.eq.s32.totalorder %v202, %v290
    %vm327 = vcmp.eq.s32.totalorder %v205, %v290
    %vm328 = vcmp.eq.s32.totalorder %v208, %v290
    %vm329 = vcmp.eq.s32.totalorder %v211, %v290
    %vm330 = vcmp.eq.s32.totalorder %v214, %v290
    %vm331 = vcmp.eq.s32.totalorder %v217, %v290
    %vm332 = vcmp.eq.s32.totalorder %v220, %v290
    %vm333 = vcmp.eq.s32.totalorder %v223, %v290
    %vm334 = vcmp.eq.s32.totalorder %v226, %v290
    %vm335 = vcmp.eq.s32.totalorder %v229, %v290
    %vm336 = vcmp.eq.s32.totalorder %v232, %v290
    %vm337 = vcmp.eq.s32.totalorder %v235, %v290
    %vm338 = vcmp.eq.s32.totalorder %v238, %v290
    %vm339 = vcmp.eq.s32.totalorder %v241, %v290
    %vm340 = vcmp.eq.s32.totalorder %v244, %v290
    %vm341 = vcmp.eq.s32.totalorder %v247, %v290
    %vm342 = vcmp.eq.s32.totalorder %v250, %v290
    %vm343 = vcmp.eq.s32.totalorder %v253, %v290
    %vm344 = vcmp.eq.s32.totalorder %v256, %v290
    %vm345 = vcmp.eq.s32.totalorder %v259, %v290
    %vm346 = vcmp.eq.s32.totalorder %v262, %v290
    %vm347 = vcmp.eq.s32.totalorder %v265, %v290
    %vm348 = vcmp.eq.s32.totalorder %v268, %v290
    %vm349 = vcmp.eq.s32.totalorder %v271, %v290
    %vm350 = vcmp.eq.s32.totalorder %v274, %v290
    %vm351 = vcmp.eq.s32.totalorder %v277, %v290
    %vm352 = vcmp.eq.s32.totalorder %v280, %v290
    %vm353 = vcmp.eq.s32.totalorder %v283, %v290
    %vm354 = vcmp.eq.s32.totalorder %v286, %v290
    %v355 = vsel %vm291, 1, 0
    %v356 = vsel %vm292, 1, 0
    %v357 = vsel %vm293, 1, 0
    %v358 = vsel %vm294, 1, 0
    %v359 = vsel %vm295, 1, 0
    %v360 = vsel %vm296, 1, 0
    %v361 = vsel %vm297, 1, 0
    %v362 = vsel %vm298, 1, 0
    %v363 = vsel %vm299, 1, 0
    %v364 = vsel %vm300, 1, 0
    %v365 = vsel %vm301, 1, 0
    %v366 = vsel %vm302, 1, 0
    %v367 = vsel %vm303, 1, 0
    %v368 = vsel %vm304, 1, 0
    %v369 = vsel %vm305, 1, 0
    %v370 = vsel %vm306, 1, 0
    %v371 = vsel %vm307, 1, 0
    %v372 = vsel %vm308, 1, 0
    %v373 = vsel %vm309, 1, 0
    %v374 = vsel %vm310, 1, 0
    %v375 = vsel %vm311, 1, 0
    %v376 = vsel %vm312, 1, 0
    %v377 = vsel %vm313, 1, 0
    %v378 = vsel %vm314, 1, 0
    %v379 = vsel %vm315, 1, 0
    %v380 = vsel %vm316, 1, 0
    %v381 = vsel %vm317, 1, 0
    %v382 = vsel %vm318, 1, 0
    %v383 = vsel %vm319, 1, 0
    %v384 = vsel %vm320, 1, 0
    %v385 = vsel %vm321, 1, 0
    %v386 = vsel %vm322, 1, 0
    %v387 = vsel %vm323, 1, 0
    %v388 = vsel %vm324, 1, 0
    %v389 = vsel %vm325, 1, 0
    %v390 = vsel %vm326, 1, 0
    %v391 = vsel %vm327, 1, 0
    %v392 = vsel %vm328, 1, 0
    %v393 = vsel %vm329, 1, 0
    %v394 = vsel %vm330, 1, 0
    %v395 = vsel %vm331, 1, 0
    %v396 = vsel %vm332, 1, 0
    %v397 = vsel %vm333, 1, 0
    %v398 = vsel %vm334, 1, 0
    %v399 = vsel %vm335, 1, 0
    %v400 = vsel %vm336, 1, 0
    %v401 = vsel %vm337, 1, 0
    %v402 = vsel %vm338, 1, 0
    %v403 = vsel %vm339, 1, 0
    %v404 = vsel %vm340, 1, 0
    %v405 = vsel %vm341, 1, 0
    %v406 = vsel %vm342, 1, 0
    %v407 = vsel %vm343, 1, 0
    %v408 = vsel %vm344, 1, 0
    %v409 = vsel %vm345, 1, 0
    %v410 = vsel %vm346, 1, 0
    %v411 = vsel %vm347, 1, 0
    %v412 = vsel %vm348, 1, 0
    %v413 = vsel %vm349, 1, 0
    %v414 = vsel %vm350, 1, 0
    %v415 = vsel %vm351, 1, 0
    %v416 = vsel %vm352, 1, 0
    %v417 = vsel %vm353, 1, 0
    %v418 = vsel %vm354, 1, 0
    %v419 = vcvt.s32.f32 %v355
    %v420 = vcvt.s32.f32 %v356
    %v421 = vcvt.s32.f32 %v357
    %v422 = vcvt.s32.f32 %v358
    %v423 = vcvt.s32.f32 %v359
    %v424 = vcvt.s32.f32 %v360
    %v425 = vcvt.s32.f32 %v361
    %v426 = vcvt.s32.f32 %v362
    %v427 = vcvt.s32.f32 %v363
    %v428 = vcvt.s32.f32 %v364
    %v429 = vcvt.s32.f32 %v365
    %v430 = vcvt.s32.f32 %v366
    %v431 = vcvt.s32.f32 %v367
    %v432 = vcvt.s32.f32 %v368
    %v433 = vcvt.s32.f32 %v369
    %v434 = vcvt.s32.f32 %v370
    %v435 = vcvt.s32.f32 %v371
    %v436 = vcvt.s32.f32 %v372
    %v437 = vcvt.s32.f32 %v373
    %v438 = vcvt.s32.f32 %v374
    %v439 = vcvt.s32.f32 %v375
    %v440 = vcvt.s32.f32 %v376
    %v441 = vcvt.s32.f32 %v377
    %v442 = vcvt.s32.f32 %v378
    %v443 = vcvt.s32.f32 %v379
    %v444 = vcvt.s32.f32 %v380
    %v445 = vcvt.s32.f32 %v381
    %v446 = vcvt.s32.f32 %v382
    %v447 = vcvt.s32.f32 %v383
    %v448 = vcvt.s32.f32 %v384
    %v449 = vcvt.s32.f32 %v385
    %v450 = vcvt.s32.f32 %v386
    %v451 = vcvt.s32.f32 %v387
    %v452 = vcvt.s32.f32 %v388
    %v453 = vcvt.s32.f32 %v389
    %v454 = vcvt.s32.f32 %v390
    %v455 = vcvt.s32.f32 %v391
    %v456 = vcvt.s32.f32 %v392
    %v457 = vcvt.s32.f32 %v393
    %v458 = vcvt.s32.f32 %v394
    %v459 = vcvt.s32.f32 %v395
    %v460 = vcvt.s32.f32 %v396
    %v461 = vcvt.s32.f32 %v397
    %v462 = vcvt.s32.f32 %v398
    %v463 = vcvt.s32.f32 %v399
    %v464 = vcvt.s32.f32 %v400
    %v465 = vcvt.s32.f32 %v401
    %v466 = vcvt.s32.f32 %v402
    %v467 = vcvt.s32.f32 %v403
    %v468 = vcvt.s32.f32 %v404
    %v469 = vcvt.s32.f32 %v405
    %v470 = vcvt.s32.f32 %v406
    %v471 = vcvt.s32.f32 %v407
    %v472 = vcvt.s32.f32 %v408
    %v473 = vcvt.s32.f32 %v409
    %v474 = vcvt.s32.f32 %v410
    %v475 = vcvt.s32.f32 %v411
    %v476 = vcvt.s32.f32 %v412
    %v477 = vcvt.s32.f32 %v413
    %v478 = vcvt.s32.f32 %v414
    %v479 = vcvt.s32.f32 %v415
    %v480 = vcvt.s32.f32 %v416
    %v481 = vcvt.s32.f32 %v417
    %v482 = vcvt.s32.f32 %v418
    %v483 = vpack.c.bf16 %v420, %v419
    %v484 = vpack.c.bf16 %v422, %v421
    %v485 = vpack.c.bf16 %v424, %v423
    %v486 = vpack.c.bf16 %v426, %v425
    %v487 = vpack.c.bf16 %v428, %v427
    %v488 = vpack.c.bf16 %v430, %v429
    %v489 = vpack.c.bf16 %v432, %v431
    %v490 = vpack.c.bf16 %v434, %v433
    %v491 = vpack.c.bf16 %v436, %v435
    %v492 = vpack.c.bf16 %v438, %v437
    %v493 = vpack.c.bf16 %v440, %v439
    %v494 = vpack.c.bf16 %v442, %v441
    %v495 = vpack.c.bf16 %v444, %v443
    %v496 = vpack.c.bf16 %v446, %v445
    %v497 = vpack.c.bf16 %v448, %v447
    %v498 = vpack.c.bf16 %v450, %v449
    %v499 = vpack.c.bf16 %v452, %v451
    %v500 = vpack.c.bf16 %v454, %v453
    %v501 = vpack.c.bf16 %v456, %v455
    %v502 = vpack.c.bf16 %v458, %v457
    %v503 = vpack.c.bf16 %v460, %v459
    %v504 = vpack.c.bf16 %v462, %v461
    %v505 = vpack.c.bf16 %v464, %v463
    %v506 = vpack.c.bf16 %v466, %v465
    %v507 = vpack.c.bf16 %v468, %v467
    %v508 = vpack.c.bf16 %v470, %v469
    %v509 = vpack.c.bf16 %v472, %v471
    %v510 = vpack.c.bf16 %v474, %v473
    %v511 = vpack.c.bf16 %v476, %v475
    %v512 = vpack.c.bf16 %v478, %v477
    %v513 = vpack.c.bf16 %v480, %v479
    %v514 = vpack.c.bf16 %v482, %v481
    %v515 = vld [vmem:[%s2] sm:$0xf]
    %v516 = vld [vmem:[%s2 + $0x4] sm:$0xf]
    %v517 = vld [vmem:[%s2 + $0x8] sm:$0xf]
    %v518 = vld [vmem:[%s2 + $0xc] sm:$0xf]
    %v519 = vld [vmem:[%s2 + $0x10] sm:$0xf]
    %v520 = vld [vmem:[%s2 + $0x14] sm:$0xf]
    %v521 = vld [vmem:[%s2 + $0x18] sm:$0xf]
    %v522 = vld [vmem:[%s2 + $0x1c] sm:$0xf]
    %v523 = vld [vmem:[%s2 + $0x20] sm:$0xf]
    %v524 = vld [vmem:[%s2 + $0x24] sm:$0xf]
    %v525 = vld [vmem:[%s2 + $0x28] sm:$0xf]
    %v526 = vld [vmem:[%s2 + $0x2c] sm:$0xf]
    %v527 = vld [vmem:[%s2 + $0x30] sm:$0xf]
    %v528 = vld [vmem:[%s2 + $0x34] sm:$0xf]
    %v529 = vld [vmem:[%s2 + $0x38] sm:$0xf]
    %v530 = vld [vmem:[%s2 + $0x3c] sm:$0xf]
    %v531 = vld [vmem:[%s3] sm:$0x1]
    %v533 = vlaneseq
    %v534 = vshrl.u32 %v533, 7
    %v535 = vsub.s32 0, %v534
    %v536 = vrot.slane %v531, %v535
    %v554 = vunpack.c.l.b16 %v515
    %v555 = vunpack.c.l.b16 %v516
    %v556 = vunpack.c.l.b16 %v517
    %v557 = vunpack.c.l.b16 %v518
    %v558 = vunpack.c.l.b16 %v519
    %v559 = vunpack.c.l.b16 %v520
    %v560 = vunpack.c.l.b16 %v521
    %v561 = vunpack.c.l.b16 %v522
    %v562 = vunpack.c.l.b16 %v523
    %v563 = vunpack.c.l.b16 %v524
    %v564 = vunpack.c.l.b16 %v525
    %v565 = vunpack.c.l.b16 %v526
    %v566 = vunpack.c.l.b16 %v527
    %v567 = vunpack.c.l.b16 %v528
    %v568 = vunpack.c.l.b16 %v529
    %v569 = vunpack.c.l.b16 %v530
    %v570 = vpack.c.b16 %v555, %v554
    %v571 = vpack.c.b16 %v557, %v556
    %v572 = vpack.c.b16 %v559, %v558
    %v573 = vpack.c.b16 %v561, %v560
    %v574 = vpack.c.b16 %v563, %v562
    %v575 = vpack.c.b16 %v565, %v564
    %v576 = vpack.c.b16 %v567, %v566
    %v577 = vpack.c.b16 %v569, %v568
    %586 = vmatprep.subr.bf16.mxu0 0
    %587 = vmatpush1.bf16.msra.mxu0 %v577
    %588 = vmatprep.subr.bf16.mxu0 0
    %589 = vmatpush1.bf16.msra.mxu0 %v576
    %590 = vmatprep.subr.bf16.mxu0 0
    %591 = vmatpush1.bf16.msra.mxu0 %v575
    %592 = vmatprep.subr.bf16.mxu0 0
    %593 = vmatpush1.bf16.msra.mxu0 %v574
    %594 = vmatprep.subr.bf16.mxu0 0
    %595 = vmatpush1.bf16.msra.mxu0 %v573
    %596 = vmatprep.subr.bf16.mxu0 0
    %597 = vmatpush1.bf16.msra.mxu0 %v572
    %598 = vmatprep.subr.bf16.mxu0 0
    %599 = vmatpush1.bf16.msra.mxu0 %v571
    %600 = vmatprep.subr.bf16.mxu0 0
    %601 = vmatpush1.bf16.msra.mxu0 %v570
    %602 = vmatprep.subr.bf16.mxu0 0
    %603 = vmatpush2.bf16.msra.mxu0 0
    %604 = vmatprep.subr.bf16.mxu0 0
    %605 = vmatpush2.bf16.msra.mxu0 0
    %606 = vmatprep.subr.bf16.mxu0 0
    %607 = vmatpush2.bf16.msra.mxu0 0
    %608 = vmatprep.subr.bf16.mxu0 0
    %609 = vmatpush2.bf16.msra.mxu0 0
    %610 = vmatprep.subr.bf16.mxu0 0
    %611 = vmatpush2.bf16.msra.mxu0 0
    %612 = vmatprep.subr.bf16.mxu0 0
    %613 = vmatpush2.bf16.msra.mxu0 0
    %614 = vmatprep.subr.bf16.mxu0 0
    %615 = vmatpush2.bf16.msra.mxu0 0
    %616 = vmatprep.subr.bf16.mxu0 0
    %617 = vmatpush2.bf16.msra.mxu0 0
    %618 = vmatprep.mubr.bf16.mxu0 0
    %619 = vmatmul.mubr.bf16.gmra.mxu0 %v483
    %v620 = vpop.f32.mrf.mxu0
    %v621 = vadd.f32 %v536, %v620
    %v622 = vpop.f32.mrf.mxu0
    %v623 = vpop.f32.mrf.mxu0
    %v624 = vadd.f32 %v536, %v623
    %v625 = vpop.f32.mrf.mxu0
    %626 = vmatprep.mubr.bf16.mxu0 0
    %627 = vmatmul.mubr.bf16.gmra.mxu0 %v484
    %v628 = vpop.f32.mrf.mxu0
    %v629 = vadd.f32 %v536, %v628
    %v630 = vpop.f32.mrf.mxu0
    %v631 = vpop.f32.mrf.mxu0
    %v632 = vadd.f32 %v536, %v631
    %v633 = vpop.f32.mrf.mxu0
    %634 = vmatprep.mubr.bf16.mxu0 0
    %635 = vmatmul.mubr.bf16.gmra.mxu0 %v485
    %v636 = vpop.f32.mrf.mxu0
    %v637 = vadd.f32 %v536, %v636
    %v638 = vpop.f32.mrf.mxu0
    %v639 = vpop.f32.mrf.mxu0
    %v640 = vadd.f32 %v536, %v639
    %v641 = vpop.f32.mrf.mxu0
    %642 = vmatprep.mubr.bf16.mxu0 0
    %643 = vmatmul.mubr.bf16.gmra.mxu0 %v486
    %v644 = vpop.f32.mrf.mxu0
    %v645 = vadd.f32 %v536, %v644
    %v646 = vpop.f32.mrf.mxu0
    %v647 = vpop.f32.mrf.mxu0
    %v648 = vadd.f32 %v536, %v647
    %v649 = vpop.f32.mrf.mxu0
    %650 = vmatprep.mubr.bf16.mxu0 0
    %651 = vmatmul.mubr.bf16.gmra.mxu0 %v487
    %v652 = vpop.f32.mrf.mxu0
    %v653 = vadd.f32 %v536, %v652
    %v654 = vpop.f32.mrf.mxu0
    %v655 = vpop.f32.mrf.mxu0
    %v656 = vadd.f32 %v536, %v655
    %v657 = vpop.f32.mrf.mxu0
    %658 = vmatprep.mubr.bf16.mxu0 0
    %659 = vmatmul.mubr.bf16.gmra.mxu0 %v488
    %v660 = vpop.f32.mrf.mxu0
    %v661 = vadd.f32 %v536, %v660
    %v662 = vpop.f32.mrf.mxu0
    %v663 = vpop.f32.mrf.mxu0
    %v664 = vadd.f32 %v536, %v663
    %v665 = vpop.f32.mrf.mxu0
    %666 = vmatprep.mubr.bf16.mxu0 0
    %667 = vmatmul.mubr.bf16.gmra.mxu0 %v489
    %v668 = vpop.f32.mrf.mxu0
    %v669 = vadd.f32 %v536, %v668
    %v670 = vpop.f32.mrf.mxu0
    %v671 = vpop.f32.mrf.mxu0
    %v672 = vadd.f32 %v536, %v671
    %v673 = vpop.f32.mrf.mxu0
    %674 = vmatprep.mubr.bf16.mxu0 0
    %675 = vmatmul.mubr.bf16.gmra.mxu0 %v490
    %v676 = vpop.f32.mrf.mxu0
    %v677 = vadd.f32 %v536, %v676
    %v678 = vpop.f32.mrf.mxu0
    %v679 = vpop.f32.mrf.mxu0
    %v680 = vadd.f32 %v536, %v679
    %v681 = vpop.f32.mrf.mxu0
    %682 = vmatprep.mubr.bf16.mxu0 0
    %683 = vmatmul.mubr.bf16.gmra.mxu0 %v491
    %v684 = vpop.f32.mrf.mxu0
    %v685 = vadd.f32 %v536, %v684
    %v686 = vpop.f32.mrf.mxu0
    %v687 = vpop.f32.mrf.mxu0
    %v688 = vadd.f32 %v536, %v687
    %v689 = vpop.f32.mrf.mxu0
    %690 = vmatprep.mubr.bf16.mxu0 0
    %691 = vmatmul.mubr.bf16.gmra.mxu0 %v492
    %v692 = vpop.f32.mrf.mxu0
    %v693 = vadd.f32 %v536, %v692
    %v694 = vpop.f32.mrf.mxu0
    %v695 = vpop.f32.mrf.mxu0
    %v696 = vadd.f32 %v536, %v695
    %v697 = vpop.f32.mrf.mxu0
    %698 = vmatprep.mubr.bf16.mxu0 0
    %699 = vmatmul.mubr.bf16.gmra.mxu0 %v493
    %v700 = vpop.f32.mrf.mxu0
    %v701 = vadd.f32 %v536, %v700
    %v702 = vpop.f32.mrf.mxu0
    %v703 = vpop.f32.mrf.mxu0
    %v704 = vadd.f32 %v536, %v703
    %v705 = vpop.f32.mrf.mxu0
    %706 = vmatprep.mubr.bf16.mxu0 0
    %707 = vmatmul.mubr.bf16.gmra.mxu0 %v494
    %v708 = vpop.f32.mrf.mxu0
    %v709 = vadd.f32 %v536, %v708
    %v710 = vpop.f32.mrf.mxu0
    %v711 = vpop.f32.mrf.mxu0
    %v712 = vadd.f32 %v536, %v711
    %v713 = vpop.f32.mrf.mxu0
    %714 = vmatprep.mubr.bf16.mxu0 0
    %715 = vmatmul.mubr.bf16.gmra.mxu0 %v495
    %v716 = vpop.f32.mrf.mxu0
    %v717 = vadd.f32 %v536, %v716
    %v718 = vpop.f32.mrf.mxu0
    %v719 = vpop.f32.mrf.mxu0
    %v720 = vadd.f32 %v536, %v719
    %v721 = vpop.f32.mrf.mxu0
    %722 = vmatprep.mubr.bf16.mxu0 0
    %723 = vmatmul.mubr.bf16.gmra.mxu0 %v496
    %v724 = vpop.f32.mrf.mxu0
    %v725 = vadd.f32 %v536, %v724
    %v726 = vpop.f32.mrf.mxu0
    %v727 = vpop.f32.mrf.mxu0
    %v728 = vadd.f32 %v536, %v727
    %v729 = vpop.f32.mrf.mxu0
    %730 = vmatprep.mubr.bf16.mxu0 0
    %731 = vmatmul.mubr.bf16.gmra.mxu0 %v497
    %v732 = vpop.f32.mrf.mxu0
    %v733 = vadd.f32 %v536, %v732
    %v734 = vpop.f32.mrf.mxu0
    %v735 = vpop.f32.mrf.mxu0
    %v736 = vadd.f32 %v536, %v735
    %v737 = vpop.f32.mrf.mxu0
    %738 = vmatprep.mubr.bf16.mxu0 0
    %739 = vmatmul.mubr.bf16.gmra.mxu0 %v498
    %v740 = vpop.f32.mrf.mxu0
    %v741 = vadd.f32 %v536, %v740
    %v742 = vpop.f32.mrf.mxu0
    %v743 = vpop.f32.mrf.mxu0
    %v744 = vadd.f32 %v536, %v743
    %v745 = vpop.f32.mrf.mxu0
    %746 = vmatprep.mubr.bf16.mxu0 0
    %747 = vmatmul.mubr.bf16.gmra.mxu0 %v499
    %v748 = vpop.f32.mrf.mxu0
    %v749 = vadd.f32 %v536, %v748
    %v750 = vpop.f32.mrf.mxu0
    %v751 = vpop.f32.mrf.mxu0
    %v752 = vadd.f32 %v536, %v751
    %v753 = vpop.f32.mrf.mxu0
    %754 = vmatprep.mubr.bf16.mxu0 0
    %755 = vmatmul.mubr.bf16.gmra.mxu0 %v500
    %v756 = vpop.f32.mrf.mxu0
    %v757 = vadd.f32 %v536, %v756
    %v758 = vpop.f32.mrf.mxu0
    %v759 = vpop.f32.mrf.mxu0
    %v760 = vadd.f32 %v536, %v759
    %v761 = vpop.f32.mrf.mxu0
    %762 = vmatprep.mubr.bf16.mxu0 0
    %763 = vmatmul.mubr.bf16.gmra.mxu0 %v501
    %v764 = vpop.f32.mrf.mxu0
    %v765 = vadd.f32 %v536, %v764
    %v766 = vpop.f32.mrf.mxu0
    %v767 = vpop.f32.mrf.mxu0
    %v768 = vadd.f32 %v536, %v767
    %v769 = vpop.f32.mrf.mxu0
    %770 = vmatprep.mubr.bf16.mxu0 0
    %771 = vmatmul.mubr.bf16.gmra.mxu0 %v502
    %v772 = vpop.f32.mrf.mxu0
    %v773 = vadd.f32 %v536, %v772
    %v774 = vpop.f32.mrf.mxu0
    %v775 = vpop.f32.mrf.mxu0
    %v776 = vadd.f32 %v536, %v775
    %v777 = vpop.f32.mrf.mxu0
    %778 = vmatprep.mubr.bf16.mxu0 0
    %779 = vmatmul.mubr.bf16.gmra.mxu0 %v503
    %v780 = vpop.f32.mrf.mxu0
    %v781 = vadd.f32 %v536, %v780
    %v782 = vpop.f32.mrf.mxu0
    %v783 = vpop.f32.mrf.mxu0
    %v784 = vadd.f32 %v536, %v783
    %v785 = vpop.f32.mrf.mxu0
    %786 = vmatprep.mubr.bf16.mxu0 0
    %787 = vmatmul.mubr.bf16.gmra.mxu0 %v504
    %v788 = vpop.f32.mrf.mxu0
    %v789 = vadd.f32 %v536, %v788
    %v790 = vpop.f32.mrf.mxu0
    %v791 = vpop.f32.mrf.mxu0
    %v792 = vadd.f32 %v536, %v791
    %v793 = vpop.f32.mrf.mxu0
    %794 = vmatprep.mubr.bf16.mxu0 0
    %795 = vmatmul.mubr.bf16.gmra.mxu0 %v505
    %v796 = vpop.f32.mrf.mxu0
    %v797 = vadd.f32 %v536, %v796
    %v798 = vpop.f32.mrf.mxu0
    %v799 = vpop.f32.mrf.mxu0
    %v800 = vadd.f32 %v536, %v799
    %v801 = vpop.f32.mrf.mxu0
    %802 = vmatprep.mubr.bf16.mxu0 0
    %803 = vmatmul.mubr.bf16.gmra.mxu0 %v506
    %v804 = vpop.f32.mrf.mxu0
    %v805 = vadd.f32 %v536, %v804
    %v806 = vpop.f32.mrf.mxu0
    %v807 = vpop.f32.mrf.mxu0
    %v808 = vadd.f32 %v536, %v807
    %v809 = vpop.f32.mrf.mxu0
    %810 = vmatprep.mubr.bf16.mxu0 0
    %811 = vmatmul.mubr.bf16.gmra.mxu0 %v507
    %v812 = vpop.f32.mrf.mxu0
    %v813 = vadd.f32 %v536, %v812
    %v814 = vpop.f32.mrf.mxu0
    %v815 = vpop.f32.mrf.mxu0
    %v816 = vadd.f32 %v536, %v815
    %v817 = vpop.f32.mrf.mxu0
    %818 = vmatprep.mubr.bf16.mxu0 0
    %819 = vmatmul.mubr.bf16.gmra.mxu0 %v508
    %v820 = vpop.f32.mrf.mxu0
    %v821 = vadd.f32 %v536, %v820
    %v822 = vpop.f32.mrf.mxu0
    %v823 = vpop.f32.mrf.mxu0
    %v824 = vadd.f32 %v536, %v823
    %v825 = vpop.f32.mrf.mxu0
    %826 = vmatprep.mubr.bf16.mxu0 0
    %827 = vmatmul.mubr.bf16.gmra.mxu0 %v509
    %v828 = vpop.f32.mrf.mxu0
    %v829 = vadd.f32 %v536, %v828
    %v830 = vpop.f32.mrf.mxu0
    %v831 = vpop.f32.mrf.mxu0
    %v832 = vadd.f32 %v536, %v831
    %v833 = vpop.f32.mrf.mxu0
    %834 = vmatprep.mubr.bf16.mxu0 0
    %835 = vmatmul.mubr.bf16.gmra.mxu0 %v510
    %v836 = vpop.f32.mrf.mxu0
    %v837 = vadd.f32 %v536, %v836
    %v838 = vpop.f32.mrf.mxu0
    %v839 = vpop.f32.mrf.mxu0
    %v840 = vadd.f32 %v536, %v839
    %v841 = vpop.f32.mrf.mxu0
    %842 = vmatprep.mubr.bf16.mxu0 0
    %843 = vmatmul.mubr.bf16.gmra.mxu0 %v511
    %v844 = vpop.f32.mrf.mxu0
    %v845 = vadd.f32 %v536, %v844
    %v846 = vpop.f32.mrf.mxu0
    %v847 = vpop.f32.mrf.mxu0
    %v848 = vadd.f32 %v536, %v847
    %v849 = vpop.f32.mrf.mxu0
    %850 = vmatprep.mubr.bf16.mxu0 0
    %851 = vmatmul.mubr.bf16.gmra.mxu0 %v512
    %v852 = vpop.f32.mrf.mxu0
    %v853 = vadd.f32 %v536, %v852
    %v854 = vpop.f32.mrf.mxu0
    %v855 = vpop.f32.mrf.mxu0
    %v856 = vadd.f32 %v536, %v855
    %v857 = vpop.f32.mrf.mxu0
    %858 = vmatprep.mubr.bf16.mxu0 0
    %859 = vmatmul.mubr.bf16.gmra.mxu0 %v513
    %v860 = vpop.f32.mrf.mxu0
    %v861 = vadd.f32 %v536, %v860
    %v862 = vpop.f32.mrf.mxu0
    %v863 = vpop.f32.mrf.mxu0
    %v864 = vadd.f32 %v536, %v863
    %v865 = vpop.f32.mrf.mxu0
    %866 = vmatprep.mubr.bf16.mxu0 0
    %867 = vmatmul.mubr.bf16.gmra.mxu0 %v514
    %v868 = vpop.f32.mrf.mxu0
    %v869 = vadd.f32 %v536, %v868
    %v870 = vpop.f32.mrf.mxu0
    %v871 = vpop.f32.mrf.mxu0
    %v872 = vadd.f32 %v536, %v871
    %v873 = vpop.f32.mrf.mxu0
    %874 = vdwg.mxu0
    %v875 = vmul.f32 %v621, %v621
    %v876 = vmul.f32 %v624, %v624
    %v877 = vmul.f32 %v629, %v629
    %v878 = vmul.f32 %v632, %v632
    %v879 = vmul.f32 %v637, %v637
    %v880 = vmul.f32 %v640, %v640
    %v881 = vmul.f32 %v645, %v645
    %v882 = vmul.f32 %v648, %v648
    %v883 = vmul.f32 %v653, %v653
    %v884 = vmul.f32 %v656, %v656
    %v885 = vmul.f32 %v661, %v661
    %v886 = vmul.f32 %v664, %v664
    %v887 = vmul.f32 %v669, %v669
    %v888 = vmul.f32 %v672, %v672
    %v889 = vmul.f32 %v677, %v677
    %v890 = vmul.f32 %v680, %v680
    %v891 = vmul.f32 %v685, %v685
    %v892 = vmul.f32 %v688, %v688
    %v893 = vmul.f32 %v693, %v693
    %v894 = vmul.f32 %v696, %v696
    %v895 = vmul.f32 %v701, %v701
    %v896 = vmul.f32 %v704, %v704
    %v897 = vmul.f32 %v709, %v709
    %v898 = vmul.f32 %v712, %v712
    %v899 = vmul.f32 %v717, %v717
    %v900 = vmul.f32 %v720, %v720
    %v901 = vmul.f32 %v725, %v725
    %v902 = vmul.f32 %v728, %v728
    %v903 = vmul.f32 %v733, %v733
    %v904 = vmul.f32 %v736, %v736
    %v905 = vmul.f32 %v741, %v741
    %v906 = vmul.f32 %v744, %v744
    %v907 = vmul.f32 %v749, %v749
    %v908 = vmul.f32 %v752, %v752
    %v909 = vmul.f32 %v757, %v757
    %v910 = vmul.f32 %v760, %v760
    %v911 = vmul.f32 %v765, %v765
    %v912 = vmul.f32 %v768, %v768
    %v913 = vmul.f32 %v773, %v773
    %v914 = vmul.f32 %v776, %v776
    %v915 = vmul.f32 %v781, %v781
    %v916 = vmul.f32 %v784, %v784
    %v917 = vmul.f32 %v789, %v789
    %v918 = vmul.f32 %v792, %v792
    %v919 = vmul.f32 %v797, %v797
    %v920 = vmul.f32 %v800, %v800
    %v921 = vmul.f32 %v805, %v805
    %v922 = vmul.f32 %v808, %v808
    %v923 = vmul.f32 %v813, %v813
    %v924 = vmul.f32 %v816, %v816
    %v925 = vmul.f32 %v821, %v821
    %v926 = vmul.f32 %v824, %v824
    %v927 = vmul.f32 %v829, %v829
    %v928 = vmul.f32 %v832, %v832
    %v929 = vmul.f32 %v837, %v837
    %v930 = vmul.f32 %v840, %v840
    %v931 = vmul.f32 %v845, %v845
    %v932 = vmul.f32 %v848, %v848
    %v933 = vmul.f32 %v853, %v853
    %v934 = vmul.f32 %v856, %v856
    %v935 = vmul.f32 %v861, %v861
    %v936 = vmul.f32 %v864, %v864
    %v937 = vmul.f32 %v869, %v869
    %v938 = vmul.f32 %v872, %v872
    %v939 = vmul.f32 %v621, %v875
    %v940 = vmul.f32 %v624, %v876
    %v941 = vmul.f32 %v629, %v877
    %v942 = vmul.f32 %v632, %v878
    %v943 = vmul.f32 %v637, %v879
    %v944 = vmul.f32 %v640, %v880
    %v945 = vmul.f32 %v645, %v881
    %v946 = vmul.f32 %v648, %v882
    %v947 = vmul.f32 %v653, %v883
    %v948 = vmul.f32 %v656, %v884
    %v949 = vmul.f32 %v661, %v885
    %v950 = vmul.f32 %v664, %v886
    %v951 = vmul.f32 %v669, %v887
    %v952 = vmul.f32 %v672, %v888
    %v953 = vmul.f32 %v677, %v889
    %v954 = vmul.f32 %v680, %v890
    %v955 = vmul.f32 %v685, %v891
    %v956 = vmul.f32 %v688, %v892
    %v957 = vmul.f32 %v693, %v893
    %v958 = vmul.f32 %v696, %v894
    %v959 = vmul.f32 %v701, %v895
    %v960 = vmul.f32 %v704, %v896
    %v961 = vmul.f32 %v709, %v897
    %v962 = vmul.f32 %v712, %v898
    %v963 = vmul.f32 %v717, %v899
    %v964 = vmul.f32 %v720, %v900
    %v965 = vmul.f32 %v725, %v901
    %v966 = vmul.f32 %v728, %v902
    %v967 = vmul.f32 %v733, %v903
    %v968 = vmul.f32 %v736, %v904
    %v969 = vmul.f32 %v741, %v905
    %v970 = vmul.f32 %v744, %v906
    %v971 = vmul.f32 %v749, %v907
    %v972 = vmul.f32 %v752, %v908
    %v973 = vmul.f32 %v757, %v909
    %v974 = vmul.f32 %v760, %v910
    %v975 = vmul.f32 %v765, %v911
    %v976 = vmul.f32 %v768, %v912
    %v977 = vmul.f32 %v773, %v913
    %v978 = vmul.f32 %v776, %v914
    %v979 = vmul.f32 %v781, %v915
    %v980 = vmul.f32 %v784, %v916
    %v981 = vmul.f32 %v789, %v917
    %v982 = vmul.f32 %v792, %v918
    %v983 = vmul.f32 %v797, %v919
    %v984 = vmul.f32 %v800, %v920
    %v985 = vmul.f32 %v805, %v921
    %v986 = vmul.f32 %v808, %v922
    %v987 = vmul.f32 %v813, %v923
    %v988 = vmul.f32 %v816, %v924
    %v989 = vmul.f32 %v821, %v925
    %v990 = vmul.f32 %v824, %v926
    %v991 = vmul.f32 %v829, %v927
    %v992 = vmul.f32 %v832, %v928
    %v993 = vmul.f32 %v837, %v929
    %v994 = vmul.f32 %v840, %v930
    %v995 = vmul.f32 %v845, %v931
    %v996 = vmul.f32 %v848, %v932
    %v997 = vmul.f32 %v853, %v933
    %v998 = vmul.f32 %v856, %v934
    %v999 = vmul.f32 %v861, %v935
    %v1000 = vmul.f32 %v864, %v936
    %v1001 = vmul.f32 %v869, %v937
    %v1002 = vmul.f32 %v872, %v938
    %v1003 = vmul.f32 %v939, 0.044715
    %v1004 = vmul.f32 %v940, 0.044715
    %v1005 = vmul.f32 %v941, 0.044715
    %v1006 = vmul.f32 %v942, 0.044715
    %v1007 = vmul.f32 %v943, 0.044715
    %v1008 = vmul.f32 %v944, 0.044715
    %v1009 = vmul.f32 %v945, 0.044715
    %v1010 = vmul.f32 %v946, 0.044715
    %v1011 = vmul.f32 %v947, 0.044715
    %v1012 = vmul.f32 %v948, 0.044715
    %v1013 = vmul.f32 %v949, 0.044715
    %v1014 = vmul.f32 %v950, 0.044715
    %v1015 = vmul.f32 %v951, 0.044715
    %v1016 = vmul.f32 %v952, 0.044715
    %v1017 = vmul.f32 %v953, 0.044715
    %v1018 = vmul.f32 %v954, 0.044715
    %v1019 = vmul.f32 %v955, 0.044715
    %v1020 = vmul.f32 %v956, 0.044715
    %v1021 = vmul.f32 %v957, 0.044715
    %v1022 = vmul.f32 %v958, 0.044715
    %v1023 = vmul.f32 %v959, 0.044715
    %v1024 = vmul.f32 %v960, 0.044715
    %v1025 = vmul.f32 %v961, 0.044715
    %v1026 = vmul.f32 %v962, 0.044715
    %v1027 = vmul.f32 %v963, 0.044715
    %v1028 = vmul.f32 %v964, 0.044715
    %v1029 = vmul.f32 %v965, 0.044715
    %v1030 = vmul.f32 %v966, 0.044715
    %v1031 = vmul.f32 %v967, 0.044715
    %v1032 = vmul.f32 %v968, 0.044715
    %v1033 = vmul.f32 %v969, 0.044715
    %v1034 = vmul.f32 %v970, 0.044715
    %v1035 = vmul.f32 %v971, 0.044715
    %v1036 = vmul.f32 %v972, 0.044715
    %v1037 = vmul.f32 %v973, 0.044715
    %v1038 = vmul.f32 %v974, 0.044715
    %v1039 = vmul.f32 %v975, 0.044715
    %v1040 = vmul.f32 %v976, 0.044715
    %v1041 = vmul.f32 %v977, 0.044715
    %v1042 = vmul.f32 %v978, 0.044715
    %v1043 = vmul.f32 %v979, 0.044715
    %v1044 = vmul.f32 %v980, 0.044715
    %v1045 = vmul.f32 %v981, 0.044715
    %v1046 = vmul.f32 %v982, 0.044715
    %v1047 = vmul.f32 %v983, 0.044715
    %v1048 = vmul.f32 %v984, 0.044715
    %v1049 = vmul.f32 %v985, 0.044715
    %v1050 = vmul.f32 %v986, 0.044715
    %v1051 = vmul.f32 %v987, 0.044715
    %v1052 = vmul.f32 %v988, 0.044715
    %v1053 = vmul.f32 %v989, 0.044715
    %v1054 = vmul.f32 %v990, 0.044715
    %v1055 = vmul.f32 %v991, 0.044715
    %v1056 = vmul.f32 %v992, 0.044715
    %v1057 = vmul.f32 %v993, 0.044715
    %v1058 = vmul.f32 %v994, 0.044715
    %v1059 = vmul.f32 %v995, 0.044715
    %v1060 = vmul.f32 %v996, 0.044715
    %v1061 = vmul.f32 %v997, 0.044715
    %v1062 = vmul.f32 %v998, 0.044715
    %v1063 = vmul.f32 %v999, 0.044715
    %v1064 = vmul.f32 %v1000, 0.044715
    %v1065 = vmul.f32 %v1001, 0.044715
    %v1066 = vmul.f32 %v1002, 0.044715
    %v1067 = vadd.f32 %v621, %v1003
    %v1068 = vadd.f32 %v624, %v1004
    %v1069 = vadd.f32 %v629, %v1005
    %v1070 = vadd.f32 %v632, %v1006
    %v1071 = vadd.f32 %v637, %v1007
    %v1072 = vadd.f32 %v640, %v1008
    %v1073 = vadd.f32 %v645, %v1009
    %v1074 = vadd.f32 %v648, %v1010
    %v1075 = vadd.f32 %v653, %v1011
    %v1076 = vadd.f32 %v656, %v1012
    %v1077 = vadd.f32 %v661, %v1013
    %v1078 = vadd.f32 %v664, %v1014
    %v1079 = vadd.f32 %v669, %v1015
    %v1080 = vadd.f32 %v672, %v1016
    %v1081 = vadd.f32 %v677, %v1017
    %v1082 = vadd.f32 %v680, %v1018
    %v1083 = vadd.f32 %v685, %v1019
    %v1084 = vadd.f32 %v688, %v1020
    %v1085 = vadd.f32 %v693, %v1021
    %v1086 = vadd.f32 %v696, %v1022
    %v1087 = vadd.f32 %v701, %v1023
    %v1088 = vadd.f32 %v704, %v1024
    %v1089 = vadd.f32 %v709, %v1025
    %v1090 = vadd.f32 %v712, %v1026
    %v1091 = vadd.f32 %v717, %v1027
    %v1092 = vadd.f32 %v720, %v1028
    %v1093 = vadd.f32 %v725, %v1029
    %v1094 = vadd.f32 %v728, %v1030
    %v1095 = vadd.f32 %v733, %v1031
    %v1096 = vadd.f32 %v736, %v1032
    %v1097 = vadd.f32 %v741, %v1033
    %v1098 = vadd.f32 %v744, %v1034
    %v1099 = vadd.f32 %v749, %v1035
    %v1100 = vadd.f32 %v752, %v1036
    %v1101 = vadd.f32 %v757, %v1037
    %v1102 = vadd.f32 %v760, %v1038
    %v1103 = vadd.f32 %v765, %v1039
    %v1104 = vadd.f32 %v768, %v1040
    %v1105 = vadd.f32 %v773, %v1041
    %v1106 = vadd.f32 %v776, %v1042
    %v1107 = vadd.f32 %v781, %v1043
    %v1108 = vadd.f32 %v784, %v1044
    %v1109 = vadd.f32 %v789, %v1045
    %v1110 = vadd.f32 %v792, %v1046
    %v1111 = vadd.f32 %v797, %v1047
    %v1112 = vadd.f32 %v800, %v1048
    %v1113 = vadd.f32 %v805, %v1049
    %v1114 = vadd.f32 %v808, %v1050
    %v1115 = vadd.f32 %v813, %v1051
    %v1116 = vadd.f32 %v816, %v1052
    %v1117 = vadd.f32 %v821, %v1053
    %v1118 = vadd.f32 %v824, %v1054
    %v1119 = vadd.f32 %v829, %v1055
    %v1120 = vadd.f32 %v832, %v1056
    %v1121 = vadd.f32 %v837, %v1057
    %v1122 = vadd.f32 %v840, %v1058
    %v1123 = vadd.f32 %v845, %v1059
    %v1124 = vadd.f32 %v848, %v1060
    %v1125 = vadd.f32 %v853, %v1061
    %v1126 = vadd.f32 %v856, %v1062
    %v1127 = vadd.f32 %v861, %v1063
    %v1128 = vadd.f32 %v864, %v1064
    %v1129 = vadd.f32 %v869, %v1065
    %v1130 = vadd.f32 %v872, %v1066
    %v1131 = vmul.f32 %v1067, 0.7978846
    %v1132 = vmul.f32 %v1068, 0.7978846
    %v1133 = vmul.f32 %v1069, 0.7978846
    %v1134 = vmul.f32 %v1070, 0.7978846
    %v1135 = vmul.f32 %v1071, 0.7978846
    %v1136 = vmul.f32 %v1072, 0.7978846
    %v1137 = vmul.f32 %v1073, 0.7978846
    %v1138 = vmul.f32 %v1074, 0.7978846
    %v1139 = vmul.f32 %v1075, 0.7978846
    %v1140 = vmul.f32 %v1076, 0.7978846
    %v1141 = vmul.f32 %v1077, 0.7978846
    %v1142 = vmul.f32 %v1078, 0.7978846
    %v1143 = vmul.f32 %v1079, 0.7978846
    %v1144 = vmul.f32 %v1080, 0.7978846
    %v1145 = vmul.f32 %v1081, 0.7978846
    %v1146 = vmul.f32 %v1082, 0.7978846
    %v1147 = vmul.f32 %v1083, 0.7978846
    %v1148 = vmul.f32 %v1084, 0.7978846
    %v1149 = vmul.f32 %v1085, 0.7978846
    %v1150 = vmul.f32 %v1086, 0.7978846
    %v1151 = vmul.f32 %v1087, 0.7978846
    %v1152 = vmul.f32 %v1088, 0.7978846
    %v1153 = vmul.f32 %v1089, 0.7978846
    %v1154 = vmul.f32 %v1090, 0.7978846
    %v1155 = vmul.f32 %v1091, 0.7978846
    %v1156 = vmul.f32 %v1092, 0.7978846
    %v1157 = vmul.f32 %v1093, 0.7978846
    %v1158 = vmul.f32 %v1094, 0.7978846
    %v1159 = vmul.f32 %v1095, 0.7978846
    %v1160 = vmul.f32 %v1096, 0.7978846
    %v1161 = vmul.f32 %v1097, 0.7978846
    %v1162 = vmul.f32 %v1098, 0.7978846
    %v1163 = vmul.f32 %v1099, 0.7978846
    %v1164 = vmul.f32 %v1100, 0.7978846
    %v1165 = vmul.f32 %v1101, 0.7978846
    %v1166 = vmul.f32 %v1102, 0.7978846
    %v1167 = vmul.f32 %v1103, 0.7978846
    %v1168 = vmul.f32 %v1104, 0.7978846
    %v1169 = vmul.f32 %v1105, 0.7978846
    %v1170 = vmul.f32 %v1106, 0.7978846
    %v1171 = vmul.f32 %v1107, 0.7978846
    %v1172 = vmul.f32 %v1108, 0.7978846
    %v1173 = vmul.f32 %v1109, 0.7978846
    %v1174 = vmul.f32 %v1110, 0.7978846
    %v1175 = vmul.f32 %v1111, 0.7978846
    %v1176 = vmul.f32 %v1112, 0.7978846
    %v1177 = vmul.f32 %v1113, 0.7978846
    %v1178 = vmul.f32 %v1114, 0.7978846
    %v1179 = vmul.f32 %v1115, 0.7978846
    %v1180 = vmul.f32 %v1116, 0.7978846
    %v1181 = vmul.f32 %v1117, 0.7978846
    %v1182 = vmul.f32 %v1118, 0.7978846
    %v1183 = vmul.f32 %v1119, 0.7978846
    %v1184 = vmul.f32 %v1120, 0.7978846
    %v1185 = vmul.f32 %v1121, 0.7978846
    %v1186 = vmul.f32 %v1122, 0.7978846
    %v1187 = vmul.f32 %v1123, 0.7978846
    %v1188 = vmul.f32 %v1124, 0.7978846
    %v1189 = vmul.f32 %v1125, 0.7978846
    %v1190 = vmul.f32 %v1126, 0.7978846
    %v1191 = vmul.f32 %v1127, 0.7978846
    %v1192 = vmul.f32 %v1128, 0.7978846
    %v1193 = vmul.f32 %v1129, 0.7978846
    %v1194 = vmul.f32 %v1130, 0.7978846
    %v1195 = vtanh.pop %v1131
    %v1196 = vtanh.pop %v1132
    %v1197 = vtanh.pop %v1133
    %v1198 = vtanh.pop %v1134
    %v1199 = vtanh.pop %v1135
    %v1200 = vtanh.pop %v1136
    %v1201 = vtanh.pop %v1137
    %v1202 = vtanh.pop %v1138
    %v1203 = vtanh.pop %v1139
    %v1204 = vtanh.pop %v1140
    %v1205 = vtanh.pop %v1141
    %v1206 = vtanh.pop %v1142
    %v1207 = vtanh.pop %v1143
    %v1208 = vtanh.pop %v1144
    %v1209 = vtanh.pop %v1145
    %v1210 = vtanh.pop %v1146
    %v1211 = vtanh.pop %v1147
    %v1212 = vtanh.pop %v1148
    %v1213 = vtanh.pop %v1149
    %v1214 = vtanh.pop %v1150
    %v1215 = vtanh.pop %v1151
    %v1216 = vtanh.pop %v1152
    %v1217 = vtanh.pop %v1153
    %v1218 = vtanh.pop %v1154
    %v1219 = vtanh.pop %v1155
    %v1220 = vtanh.pop %v1156
    %v1221 = vtanh.pop %v1157
    %v1222 = vtanh.pop %v1158
    %v1223 = vtanh.pop %v1159
    %v1224 = vtanh.pop %v1160
    %v1225 = vtanh.pop %v1161
    %v1226 = vtanh.pop %v1162
    %v1227 = vtanh.pop %v1163
    %v1228 = vtanh.pop %v1164
    %v1229 = vtanh.pop %v1165
    %v1230 = vtanh.pop %v1166
    %v1231 = vtanh.pop %v1167
    %v1232 = vtanh.pop %v1168
    %v1233 = vtanh.pop %v1169
    %v1234 = vtanh.pop %v1170
    %v1235 = vtanh.pop %v1171
    %v1236 = vtanh.pop %v1172
    %v1237 = vtanh.pop %v1173
    %v1238 = vtanh.pop %v1174
    %v1239 = vtanh.pop %v1175
    %v1240 = vtanh.pop %v1176
    %v1241 = vtanh.pop %v1177
    %v1242 = vtanh.pop %v1178
    %v1243 = vtanh.pop %v1179
    %v1244 = vtanh.pop %v1180
    %v1245 = vtanh.pop %v1181
    %v1246 = vtanh.pop %v1182
    %v1247 = vtanh.pop %v1183
    %v1248 = vtanh.pop %v1184
    %v1249 = vtanh.pop %v1185
    %v1250 = vtanh.pop %v1186
    %v1251 = vtanh.pop %v1187
    %v1252 = vtanh.pop %v1188
    %v1253 = vtanh.pop %v1189
    %v1254 = vtanh.pop %v1190
    %v1255 = vtanh.pop %v1191
    %v1256 = vtanh.pop %v1192
    %v1257 = vtanh.pop %v1193
    %v1258 = vtanh.pop %v1194
    %v1259 = vadd.f32 %v1195, 1.0
    %v1260 = vadd.f32 %v1196, 1.0
    %v1261 = vadd.f32 %v1197, 1.0
    %v1262 = vadd.f32 %v1198, 1.0
    %v1263 = vadd.f32 %v1199, 1.0
    %v1264 = vadd.f32 %v1200, 1.0
    %v1265 = vadd.f32 %v1201, 1.0
    %v1266 = vadd.f32 %v1202, 1.0
    %v1267 = vadd.f32 %v1203, 1.0
    %v1268 = vadd.f32 %v1204, 1.0
    %v1269 = vadd.f32 %v1205, 1.0
    %v1270 = vadd.f32 %v1206, 1.0
    %v1271 = vadd.f32 %v1207, 1.0
    %v1272 = vadd.f32 %v1208, 1.0
    %v1273 = vadd.f32 %v1209, 1.0
    %v1274 = vadd.f32 %v1210, 1.0
    %v1275 = vadd.f32 %v1211, 1.0
    %v1276 = vadd.f32 %v1212, 1.0
    %v1277 = vadd.f32 %v1213, 1.0
    %v1278 = vadd.f32 %v1214, 1.0
    %v1279 = vadd.f32 %v1215, 1.0
    %v1280 = vadd.f32 %v1216, 1.0
    %v1281 = vadd.f32 %v1217, 1.0
    %v1282 = vadd.f32 %v1218, 1.0
    %v1283 = vadd.f32 %v1219, 1.0
    %v1284 = vadd.f32 %v1220, 1.0
    %v1285 = vadd.f32 %v1221, 1.0
    %v1286 = vadd.f32 %v1222, 1.0
    %v1287 = vadd.f32 %v1223, 1.0
    %v1288 = vadd.f32 %v1224, 1.0
    %v1289 = vadd.f32 %v1225, 1.0
    %v1290 = vadd.f32 %v1226, 1.0
    %v1291 = vadd.f32 %v1227, 1.0
    %v1292 = vadd.f32 %v1228, 1.0
    %v1293 = vadd.f32 %v1229, 1.0
    %v1294 = vadd.f32 %v1230, 1.0
    %v1295 = vadd.f32 %v1231, 1.0
    %v1296 = vadd.f32 %v1232, 1.0
    %v1297 = vadd.f32 %v1233, 1.0
    %v1298 = vadd.f32 %v1234, 1.0
    %v1299 = vadd.f32 %v1235, 1.0
    %v1300 = vadd.f32 %v1236, 1.0
    %v1301 = vadd.f32 %v1237, 1.0
    %v1302 = vadd.f32 %v1238, 1.0
    %v1303 = vadd.f32 %v1239, 1.0
    %v1304 = vadd.f32 %v1240, 1.0
    %v1305 = vadd.f32 %v1241, 1.0
    %v1306 = vadd.f32 %v1242, 1.0
    %v1307 = vadd.f32 %v1243, 1.0
    %v1308 = vadd.f32 %v1244, 1.0
    %v1309 = vadd.f32 %v1245, 1.0
    %v1310 = vadd.f32 %v1246, 1.0
    %v1311 = vadd.f32 %v1247, 1.0
    %v1312 = vadd.f32 %v1248, 1.0
    %v1313 = vadd.f32 %v1249, 1.0
    %v1314 = vadd.f32 %v1250, 1.0
    %v1315 = vadd.f32 %v1251, 1.0
    %v1316 = vadd.f32 %v1252, 1.0
    %v1317 = vadd.f32 %v1253, 1.0
    %v1318 = vadd.f32 %v1254, 1.0
    %v1319 = vadd.f32 %v1255, 1.0
    %v1320 = vadd.f32 %v1256, 1.0
    %v1321 = vadd.f32 %v1257, 1.0
    %v1322 = vadd.f32 %v1258, 1.0
    %v1323 = vmul.f32 %v1259, 0.5
    %v1324 = vmul.f32 %v1260, 0.5
    %v1325 = vmul.f32 %v1261, 0.5
    %v1326 = vmul.f32 %v1262, 0.5
    %v1327 = vmul.f32 %v1263, 0.5
    %v1328 = vmul.f32 %v1264, 0.5
    %v1329 = vmul.f32 %v1265, 0.5
    %v1330 = vmul.f32 %v1266, 0.5
    %v1331 = vmul.f32 %v1267, 0.5
    %v1332 = vmul.f32 %v1268, 0.5
    %v1333 = vmul.f32 %v1269, 0.5
    %v1334 = vmul.f32 %v1270, 0.5
    %v1335 = vmul.f32 %v1271, 0.5
    %v1336 = vmul.f32 %v1272, 0.5
    %v1337 = vmul.f32 %v1273, 0.5
    %v1338 = vmul.f32 %v1274, 0.5
    %v1339 = vmul.f32 %v1275, 0.5
    %v1340 = vmul.f32 %v1276, 0.5
    %v1341 = vmul.f32 %v1277, 0.5
    %v1342 = vmul.f32 %v1278, 0.5
    %v1343 = vmul.f32 %v1279, 0.5
    %v1344 = vmul.f32 %v1280, 0.5
    %v1345 = vmul.f32 %v1281, 0.5
    %v1346 = vmul.f32 %v1282, 0.5
    %v1347 = vmul.f32 %v1283, 0.5
    %v1348 = vmul.f32 %v1284, 0.5
    %v1349 = vmul.f32 %v1285, 0.5
    %v1350 = vmul.f32 %v1286, 0.5
    %v1351 = vmul.f32 %v1287, 0.5
    %v1352 = vmul.f32 %v1288, 0.5
    %v1353 = vmul.f32 %v1289, 0.5
    %v1354 = vmul.f32 %v1290, 0.5
    %v1355 = vmul.f32 %v1291, 0.5
    %v1356 = vmul.f32 %v1292, 0.5
    %v1357 = vmul.f32 %v1293, 0.5
    %v1358 = vmul.f32 %v1294, 0.5
    %v1359 = vmul.f32 %v1295, 0.5
    %v1360 = vmul.f32 %v1296, 0.5
    %v1361 = vmul.f32 %v1297, 0.5
    %v1362 = vmul.f32 %v1298, 0.5
    %v1363 = vmul.f32 %v1299, 0.5
    %v1364 = vmul.f32 %v1300, 0.5
    %v1365 = vmul.f32 %v1301, 0.5
    %v1366 = vmul.f32 %v1302, 0.5
    %v1367 = vmul.f32 %v1303, 0.5
    %v1368 = vmul.f32 %v1304, 0.5
    %v1369 = vmul.f32 %v1305, 0.5
    %v1370 = vmul.f32 %v1306, 0.5
    %v1371 = vmul.f32 %v1307, 0.5
    %v1372 = vmul.f32 %v1308, 0.5
    %v1373 = vmul.f32 %v1309, 0.5
    %v1374 = vmul.f32 %v1310, 0.5
    %v1375 = vmul.f32 %v1311, 0.5
    %v1376 = vmul.f32 %v1312, 0.5
    %v1377 = vmul.f32 %v1313, 0.5
    %v1378 = vmul.f32 %v1314, 0.5
    %v1379 = vmul.f32 %v1315, 0.5
    %v1380 = vmul.f32 %v1316, 0.5
    %v1381 = vmul.f32 %v1317, 0.5
    %v1382 = vmul.f32 %v1318, 0.5
    %v1383 = vmul.f32 %v1319, 0.5
    %v1384 = vmul.f32 %v1320, 0.5
    %v1385 = vmul.f32 %v1321, 0.5
    %v1386 = vmul.f32 %v1322, 0.5
    %v1387 = vmul.f32 %v621, %v1323
    %v1388 = vmul.f32 %v624, %v1324
    %v1389 = vmul.f32 %v629, %v1325
    %v1390 = vmul.f32 %v632, %v1326
    %v1391 = vmul.f32 %v637, %v1327
    %v1392 = vmul.f32 %v640, %v1328
    %v1393 = vmul.f32 %v645, %v1329
    %v1394 = vmul.f32 %v648, %v1330
    %v1395 = vmul.f32 %v653, %v1331
    %v1396 = vmul.f32 %v656, %v1332
    %v1397 = vmul.f32 %v661, %v1333
    %v1398 = vmul.f32 %v664, %v1334
    %v1399 = vmul.f32 %v669, %v1335
    %v1400 = vmul.f32 %v672, %v1336
    %v1401 = vmul.f32 %v677, %v1337
    %v1402 = vmul.f32 %v680, %v1338
    %v1403 = vmul.f32 %v685, %v1339
    %v1404 = vmul.f32 %v688, %v1340
    %v1405 = vmul.f32 %v693, %v1341
    %v1406 = vmul.f32 %v696, %v1342
    %v1407 = vmul.f32 %v701, %v1343
    %v1408 = vmul.f32 %v704, %v1344
    %v1409 = vmul.f32 %v709, %v1345
    %v1410 = vmul.f32 %v712, %v1346
    %v1411 = vmul.f32 %v717, %v1347
    %v1412 = vmul.f32 %v720, %v1348
    %v1413 = vmul.f32 %v725, %v1349
    %v1414 = vmul.f32 %v728, %v1350
    %v1415 = vmul.f32 %v733, %v1351
    %v1416 = vmul.f32 %v736, %v1352
    %v1417 = vmul.f32 %v741, %v1353
    %v1418 = vmul.f32 %v744, %v1354
    %v1419 = vmul.f32 %v749, %v1355
    %v1420 = vmul.f32 %v752, %v1356
    %v1421 = vmul.f32 %v757, %v1357
    %v1422 = vmul.f32 %v760, %v1358
    %v1423 = vmul.f32 %v765, %v1359
    %v1424 = vmul.f32 %v768, %v1360
    %v1425 = vmul.f32 %v773, %v1361
    %v1426 = vmul.f32 %v776, %v1362
    %v1427 = vmul.f32 %v781, %v1363
    %v1428 = vmul.f32 %v784, %v1364
    %v1429 = vmul.f32 %v789, %v1365
    %v1430 = vmul.f32 %v792, %v1366
    %v1431 = vmul.f32 %v797, %v1367
    %v1432 = vmul.f32 %v800, %v1368
    %v1433 = vmul.f32 %v805, %v1369
    %v1434 = vmul.f32 %v808, %v1370
    %v1435 = vmul.f32 %v813, %v1371
    %v1436 = vmul.f32 %v816, %v1372
    %v1437 = vmul.f32 %v821, %v1373
    %v1438 = vmul.f32 %v824, %v1374
    %v1439 = vmul.f32 %v829, %v1375
    %v1440 = vmul.f32 %v832, %v1376
    %v1441 = vmul.f32 %v837, %v1377
    %v1442 = vmul.f32 %v840, %v1378
    %v1443 = vmul.f32 %v845, %v1379
    %v1444 = vmul.f32 %v848, %v1380
    %v1445 = vmul.f32 %v853, %v1381
    %v1446 = vmul.f32 %v856, %v1382
    %v1447 = vmul.f32 %v861, %v1383
    %v1448 = vmul.f32 %v864, %v1384
    %v1449 = vmul.f32 %v869, %v1385
    %v1450 = vmul.f32 %v872, %v1386
    %v1451 = vld [vmem:[#allocation2] sm:$0xff]
    %v1452 = vadd.f32 %v1387, %v1388
    %v1453 = vadd.f32 %v1452, %v1389
    %v1454 = vadd.f32 %v1453, %v1390
    %v1455 = vadd.f32 %v1454, %v1391
    %v1456 = vadd.f32 %v1455, %v1392
    %v1457 = vadd.f32 %v1456, %v1393
    %v1458 = vadd.f32 %v1457, %v1394
    %v1459 = vrot.slane %v1458, 4
    %v1460 = vadd.f32 %v1458, %v1459
    %v1461 = vrot.slane %v1460, 2
    %v1462 = vadd.f32 %v1460, %v1461
    %v1463 = vrot.slane %v1462, 1
    %v1464 = vadd.f32 %v1462, %v1463
    %v1465 = vadd.f32 %v1395, %v1396
    %v1466 = vadd.f32 %v1465, %v1397
    %v1467 = vadd.f32 %v1466, %v1398
    %v1468 = vadd.f32 %v1467, %v1399
    %v1469 = vadd.f32 %v1468, %v1400
    %v1470 = vadd.f32 %v1469, %v1401
    %v1471 = vadd.f32 %v1470, %v1402
    %v1472 = vrot.slane %v1471, 4
    %v1473 = vadd.f32 %v1471, %v1472
    %v1474 = vrot.slane %v1473, 2
    %v1475 = vadd.f32 %v1473, %v1474
    %v1476 = vrot.slane %v1475, 1
    %v1477 = vadd.f32 %v1475, %v1476
    %v1478 = vadd.f32 %v1403, %v1404
    %v1479 = vadd.f32 %v1478, %v1405
    %v1480 = vadd.f32 %v1479, %v1406
    %v1481 = vadd.f32 %v1480, %v1407
    %v1482 = vadd.f32 %v1481, %v1408
    %v1483 = vadd.f32 %v1482, %v1409
    %v1484 = vadd.f32 %v1483, %v1410
    %v1485 = vrot.slane %v1484, 4
    %v1486 = vadd.f32 %v1484, %v1485
    %v1487 = vrot.slane %v1486, 2
    %v1488 = vadd.f32 %v1486, %v1487
    %v1489 = vrot.slane %v1488, 1
    %v1490 = vadd.f32 %v1488, %v1489
    %v1491 = vadd.f32 %v1411, %v1412
    %v1492 = vadd.f32 %v1491, %v1413
    %v1493 = vadd.f32 %v1492, %v1414
    %v1494 = vadd.f32 %v1493, %v1415
    %v1495 = vadd.f32 %v1494, %v1416
    %v1496 = vadd.f32 %v1495, %v1417
    %v1497 = vadd.f32 %v1496, %v1418
    %v1498 = vrot.slane %v1497, 4
    %v1499 = vadd.f32 %v1497, %v1498
    %v1500 = vrot.slane %v1499, 2
    %v1501 = vadd.f32 %v1499, %v1500
    %v1502 = vrot.slane %v1501, 1
    %v1503 = vadd.f32 %v1501, %v1502
    %v1504 = vadd.f32 %v1419, %v1420
    %v1505 = vadd.f32 %v1504, %v1421
    %v1506 = vadd.f32 %v1505, %v1422
    %v1507 = vadd.f32 %v1506, %v1423
    %v1508 = vadd.f32 %v1507, %v1424
    %v1509 = vadd.f32 %v1508, %v1425
    %v1510 = vadd.f32 %v1509, %v1426
    %v1511 = vrot.slane %v1510, 4
    %v1512 = vadd.f32 %v1510, %v1511
    %v1513 = vrot.slane %v1512, 2
    %v1514 = vadd.f32 %v1512, %v1513
    %v1515 = vrot.slane %v1514, 1
    %v1516 = vadd.f32 %v1514, %v1515
    %v1517 = vadd.f32 %v1427, %v1428
    %v1518 = vadd.f32 %v1517, %v1429
    %v1519 = vadd.f32 %v1518, %v1430
    %v1520 = vadd.f32 %v1519, %v1431
    %v1521 = vadd.f32 %v1520, %v1432
    %v1522 = vadd.f32 %v1521, %v1433
    %v1523 = vadd.f32 %v1522, %v1434
    %v1524 = vrot.slane %v1523, 4
    %v1525 = vadd.f32 %v1523, %v1524
    %v1526 = vrot.slane %v1525, 2
    %v1527 = vadd.f32 %v1525, %v1526
    %v1528 = vrot.slane %v1527, 1
    %v1529 = vadd.f32 %v1527, %v1528
    %v1530 = vadd.f32 %v1435, %v1436
    %v1531 = vadd.f32 %v1530, %v1437
    %v1532 = vadd.f32 %v1531, %v1438
    %v1533 = vadd.f32 %v1532, %v1439
    %v1534 = vadd.f32 %v1533, %v1440
    %v1535 = vadd.f32 %v1534, %v1441
    %v1536 = vadd.f32 %v1535, %v1442
    %v1537 = vrot.slane %v1536, 4
    %v1538 = vadd.f32 %v1536, %v1537
    %v1539 = vrot.slane %v1538, 2
    %v1540 = vadd.f32 %v1538, %v1539
    %v1541 = vrot.slane %v1540, 1
    %v1542 = vadd.f32 %v1540, %v1541
    %v1543 = vadd.f32 %v1443, %v1444
    %v1544 = vadd.f32 %v1543, %v1445
    %v1545 = vadd.f32 %v1544, %v1446
    %v1546 = vadd.f32 %v1545, %v1447
    %v1547 = vadd.f32 %v1546, %v1448
    %v1548 = vadd.f32 %v1547, %v1449
    %v1549 = vadd.f32 %v1548, %v1450
    %v1550 = vrot.slane %v1549, 4
    %v1551 = vadd.f32 %v1549, %v1550
    %v1552 = vrot.slane %v1551, 2
    %v1553 = vadd.f32 %v1551, %v1552
    %v1554 = vrot.slane %v1553, 1
    %v1555 = vadd.f32 %v1553, %v1554
    %vm1564 = vcmask 1041409
    %v1565 = vsel %vm1564, %v1477, %v1464
    %vm1566 = vcmask 1042434
    %v1567 = vsel %vm1566, %v1490, %v1565
    %vm1568 = vcmask 1043459
    %v1569 = vsel %vm1568, %v1503, %v1567
    %vm1570 = vcmask 1044484
    %v1571 = vsel %vm1570, %v1516, %v1569
    %vm1572 = vcmask 1045509
    %v1573 = vsel %vm1572, %v1529, %v1571
    %vm1574 = vcmask 1046534
    %v1575 = vsel %vm1574, %v1542, %v1573
    %vm1576 = vcmask 1047559
    %v1577 = vsel %vm1576, %v1555, %v1575
    %v1579 = vadd.f32 %v1451, %v1577
    %1580 = vst [vmem:[#allocation2] sm:$0xff] %v1579
    // Predicated region
    $region30: #{tpu_custom_call.1} parent=1 // pred_check
      %p1581 = pneg %p25
    $region31: #{tpu_custom_call.1} parent=1 // pred_check_branch
      %1583 = sbr.rel (%p1581) target = $region33
    $region32: #{tpu_custom_call.1} parent=1 // pred_region
      %v1584 = vld [vmem:[#allocation2] sm:$0xff]
      %v1585 = vmul.f32 %v1584, 0.015625
      %v1586 = vrot.slane %v1585, 4
      %v1587 = vadd.f32 %v1585, %v1586
      %v1588 = vrot.slane %v1587, 2
      %v1589 = vadd.f32 %v1587, %v1588
      %v1590 = vrot.slane %v1589, 1
      %v1591 = vadd.f32 %v1589, %v1590
      %v1592 = vrcp.pop 8.0
      %v1593 = vmul.f32 %v1591, %v1592
      %v1594 = vsub.f32 %v1585, %v1593
      %v1595 = vmul.f32 %v1594, %v1594
      %v1596 = vrot.slane %v1595, 4
      %v1597 = vadd.f32 %v1595, %v1596
      %v1598 = vrot.slane %v1597, 2
      %v1599 = vadd.f32 %v1597, %v1598
      %v1600 = vrot.slane %v1599, 1
      %v1601 = vadd.f32 %v1599, %v1600
      %v1602 = vmul.f32 %v1601, %v1592
      %v1603 = vadd.f32 %v1602, 1e-05
      %v1604 = vrsqrt.pop %v1603
      %v1605 = vmul.f32 %v1594, %v1604
      %v1606 = vld [vmem:[%s4] sm:$0x1]
      %v1608 = vlaneseq
      %v1609 = vshrl.u32 %v1608, 7
      %v1610 = vsub.s32 0, %v1609
      %v1611 = vrot.slane %v1606, %v1610
      %v1613 = vmul.f32 %v1605, %v1611
      %v1614 = vld [vmem:[%s5] sm:$0x1]
      %v1616 = vlaneseq
      %v1617 = vshrl.u32 %v1616, 7
      %v1618 = vsub.s32 0, %v1617
      %v1619 = vrot.slane %v1614, %v1618
      %v1621 = vadd.f32 %v1613, %v1619
      %v1622 = vmul.f32 %v1621, %v1621
      %1623 = vadd.xlane.f32.xlu0 %v1622
      %v1624 = vpop.xlane.xlu0 %1623
      %v1625 = vrsqrt.pop %v1624
      %v1626 = vmul.f32 %v1624, %v1625
      %vm1627 = vcmp.eq.f32.partialorder %v1624, inf
      %v1628 = vsel %vm1627, %v1624, %v1626
      %vm1629 = vcmp.eq.f32.partialorder %v1624, 0.0
      %v1630 = vand.u32 %v1624, 2147483648
      %v1631 = vsel %vm1629, %v1630, %v1628
      %v1632 = vmax.f32 %v1631, 1e-12
      %v1633 = vrcp.pop %v1632
      %v1634 = vmul.f32 %v1621, %v1633
      %1635 = vst [vmem:[#allocation2] sm:$0xff] %v1634
    $region33: #{tpu_custom_call.1} parent=1 // pred_fallthru
      _
    // Predicated region
    $region34: #{tpu_custom_call.1} parent=1 // pred_check
      _
    $region35: #{tpu_custom_call.1} parent=1 // pred_check_branch
      %1637 = sbr.rel (0) target = $region37
    $region36: #{tpu_custom_call.1} parent=1 // pred_region
      %s1639 = ssub.s32 128, 128
      %1640 = vsyncadd [#allocation3], %s1639
      %s1642 = sshll.u32 [#allocation2], 4
      %s1643 = int_to_ptr.vmem [resolvable:$true] %s1642
      %1645 = dma.vmem_to_hbm [thread:$0]  %s1643, 128, %s6, [#allocation3]
    $region37: #{tpu_custom_call.1} parent=1 // pred_fallthru
      _
    // Predicated region
    $region38: #{tpu_custom_call.1} parent=1 // pred_check
      _
    $region39: #{tpu_custom_call.1} parent=1 // pred_check_branch
      %1647 = sbr.rel (0) target = $region41
    $region40: #{tpu_custom_call.1} parent=1 // pred_region
      %1648 = dma.done [#allocation3], 128
    $region41: #{tpu_custom_call.1} parent=1 // pred_fallthru
      _
    %1649 = vsyncpa [#allocation3], 1

</llo_original>
